<compile_context>
chip_gen: v5e
topology: v5e:2x2
jax: 0.10.0
libtpu: 0.0.40
codegen_flags: <defaults>
</compile_context>

<pallas_src>
import math
from functools import partial

import jax
import jax.numpy as jnp
import numpy as np
from jax import lax
from jax.experimental import pallas as pl
from jax.experimental.pallas import tpu as pltpu

EPS = 1e-8
LOG10_INV_EPS = math.log10(1.0 / EPS)   # == 8.0
NEG_BIG = -3.0e38                        # finite stand-in for -inf (max_z init)
PAD_MU_Z = -1.0e6                        # padded gaussians -> hugely negative optimal_z


# ------------------------------- kernel ------------------------------------ #
def _render_kernel(a_idx, scal_ref, bas_ref, par_ref, app_ref, out_ref):
    """One (batch, pixel-tile, gaussian-tile) grid step.

    scal_ref : SMEM [B, 2]          rows = [-1/alpha_b, a_coef_b]
    bas_ref  : VMEM [1, 16, TP]     per-pixel basis rows:
               0..5 rxx,ryy,rzz,rxy,rxz,ryz | 6 zero | 7 ones | 8..10 rx,ry,rz | 11..15 zero
    par_ref  : VMEM [1, 24, NT]     per-gaussian packed constants (lane-dense over N):
               0..5 Sxx,Syy,Szz,2Sxy,2Sxz,2Syz | 8..10 Sigma@mu | 23 mu'Sigma mu
    app_ref  : VMEM [1, A_pad, NT]  appearance^T; row A is 1 for real gaussians (-> wsum)
    out_ref  : VMEM [1, A_pad, TP]  rows 0..A-1 numerator, A wsum, A+1 per-pixel max z
               (accumulated in place across the gaussian grid axis)
    """
    b = pl.program_id(0)
    k = pl.program_id(2)
    tp = out_ref.shape[2]

    neg_inv_alpha = scal_ref[b, 0]
    a_coef = scal_ref[b, 1]

    @pl.when(k == 0)
    def _init():
        out_ref[...] = jnp.zeros_like(out_ref)
        out_ref[0, a_idx + 1:a_idx + 2, :] = jnp.full((1, tp), NEG_BIG, jnp.float32)

    dn = (((0,), (0,)), ((), ()))
    hi = lax.Precision.HIGHEST
    # r'Sigma r, r'Sigma mu, mu'Sigma mu on the MXU (K=8 each, transposed-LHS contraction).
    rsr = lax.dot_general(par_ref[0, 0:8, :], bas_ref[0, 0:8, :], dn,
                          precision=hi, preferred_element_type=jnp.float32)   # [NT, TP]
    rsm = lax.dot_general(par_ref[0, 8:16, :], bas_ref[0, 8:16, :], dn,
                          precision=hi, preferred_element_type=jnp.float32)   # [NT, TP]
    msm = lax.dot_general(par_ref[0, 16:24, :], bas_ref[0, 0:8, :], dn,
                          precision=hi, preferred_element_type=jnp.float32)   # [NT, TP] via ones row

    rsr_c = jnp.maximum(rsr, EPS)
    r0 = pl.reciprocal(rsr_c, approx=True)          # EUP
    inv_rsr = r0 * (2.0 - rsr_c * r0)               # one Newton step -> ~f32 accurate

    z = rsm * inv_rsr                               # optimal_z
    # running per-pixel max of optimal_z (row A+1); z dies right after z^2 below.
    zrow = jnp.max(z, axis=0, keepdims=True)
    out_ref[0, a_idx + 1:a_idx + 2, :] = jnp.maximum(
        out_ref[0, a_idx + 1:a_idx + 2, :], zrow)

    z2 = z * z
    q = 1.0 + z2 * z2                               # 1 + z^4
    # density(z) / clamp(sqrt(clamp(rsr,0)),eps) fused into one rsqrt (EUP).
    db = lax.rsqrt(jnp.maximum(rsr, EPS * EPS) * (q * q))
    # exp(min(-(msm - rsm^2/rsr_c)/alpha, 8)); big terms cancel before the reciprocal.
    p = msm * rsr_c - rsm * rsm
    e = jnp.exp(jnp.minimum(p * inv_rsr * neg_inv_alpha, LOG10_INV_EPS))
    # erfc-term == 1 exactly; remaining factors are >= 0 so reference clamps are no-ops.
    w = (a_coef * e) * db                           # [NT, TP]

    # numerator (rows 0..A-1) + wsum (row A via the ones row) in one MXU matmul,
    # accumulated into the VMEM-resident output block (rows > A of app are zero).
    num = jnp.dot(app_ref[0], w, preferred_element_type=jnp.float32, precision=hi)
    out_ref[0] = out_ref[0] + num


# --------------------------------- glue ------------------------------------ #
def get_pixel_grid(h, w):
    cols = jnp.arange(w, dtype=jnp.float32)
    rows = jnp.arange(h, dtype=jnp.float32)
    x, y = jnp.meshgrid(cols, rows, indexing="xy")             # [H, W]
    z = jnp.ones_like(x)
    return jnp.stack([x, y, z], axis=-1)[..., None]            # [H, W, 3, 1]


def _compute_rays(pixels, K):
    """pixels: [H, W, 3, 1], K: [B, 3, 3] -> unit rays [B, H, W, 3] (pinhole, no distortion)."""
    xyz = pixels[..., 0].astype(jnp.float32)                   # [H, W, 3]
    x, y = xyz[..., 0], xyz[..., 1]
    fx = K[:, 0, 0][:, None, None]
    fy = K[:, 1, 1][:, None, None]
    cx = K[:, 0, 2][:, None, None]
    cy = K[:, 1, 2][:, None, None]
    skew = K[:, 0, 1][:, None, None]
    yr = (y[None] - cy) / fy
    xr = (x[None] - cx - skew * yr) / fx
    zr = jnp.ones_like(xr)
    rays = jnp.stack([xr, yr, zr], axis=-1)                    # [B, H, W, 3]
    rays = rays / jnp.linalg.norm(rays, axis=-1, keepdims=True)
    return rays


def _vmem_capacity_bytes():
    try:
        info = pltpu.get_tpu_info()
        cap = getattr(info, "vmem_capacity_bytes", 0)
        if cap:
            return int(cap)
    except Exception:
        pass
    return 64 * 1024 * 1024   # conservative (v7x per-core VMEM)


def _choose_tiles(B, P, N, A_pad):
    """Pick (pixel_tile, gaussian_tile, vmem_limit) against a per-generation VMEM budget."""
    cap = _vmem_capacity_bytes()
    budget = int(cap * 0.55)
    p128 = -(-P // 128) * 128
    n8 = max(8, -(-N // 8) * 8)

    def cost(tp, nt):
        blocks = 2 * 4 * (16 * tp + 24 * nt + A_pad * nt + A_pad * tp)   # double-buffered
        temps = 9 * 4 * nt * tp                                          # live [NT, TP] f32 temps
        return blocks + temps

    tp_cands = sorted({c for c in (8192, 4096, 2048, 1024, 512, 256, 128) if c <= p128}
                      | {p128}, reverse=True)
    nt_cands = [n8] if n8 <= 2048 else [2048, 1024, 512, 256, 128]

    tile_p, n_tile = tp_cands[-1], nt_cands[-1]
    done = False
    for tp in tp_cands:
        for nt in nt_cands:
            if cost(tp, nt) <= budget:
                tile_p, n_tile = tp, nt
                done = True
                break
        if done:
            break
    # v7x: keep >= 2 steps on the (parallel) pixel axis so both TensorCores get work.
    if B == 1:
        while tile_p > 128 and -(-P // tile_p) < 2:
            tile_p = max(128, ((tile_p // 2) // 128) * 128)
    vmem_limit = int(min(cap * 0.85, max(32 * 1024 * 1024, 2 * cost(tile_p, n_tile))))
    return tile_p, n_tile, vmem_limit


def integral_raycasting_pallas(pixels, mu, rho, lambd, appearance,
                               background_appearance, K,
                               alpha=0.025, beta=2.0, eps=EPS):
    f32 = jnp.float32
    H, W = pixels.shape[0], pixels.shape[1]
    P = H * W
    B, N = mu.shape[0], mu.shape[1]
    A = appearance.shape[-1]
    A_pad = max(8, -(-(A + 2) // 8) * 8)            # numerator rows + wsum + max_z

    tile_p, n_tile, vmem_limit = _choose_tiles(B, P, N, A_pad)
    P_pad = -(-P // tile_p) * tile_p
    N_pad = -(-N // n_tile) * n_tile
    T = P_pad // tile_p
    Kn = N_pad // n_tile

    # rays -> lane-dense per-pixel basis [B, 16, P_pad] (built once in XLA)
    rays = _compute_rays(pixels, K)                                   # [B, H, W, 3]
    rays_t = rays.reshape(B, P, 3).transpose(0, 2, 1).astype(f32)     # [B, 3, P]
    rx, ry, rz = rays_t[:, 0], rays_t[:, 1], rays_t[:, 2]
    zro = jnp.zeros_like(rx)
    one = jnp.ones_like(rx)
    basis = jnp.stack([rx * rx, ry * ry, rz * rz, rx * ry, rx * rz, ry * rz,
                       zro, one, rx, ry, rz, zro, zro, zro, zro, zro], axis=1)
    basis = jnp.pad(basis, ((0, 0), (0, 0), (0, P_pad - P)))          # [B, 16, P_pad]

    # invert_lambd
    lam = lambd[..., 0].astype(f32)                                   # [B, N, 3]
    lmin = jnp.min(lam.reshape(B, -1), axis=-1)
    scale = 10.0 ** jnp.ceil(jnp.log10(jnp.maximum(lmin, 1e-6)))      # [B]
    lam_inv = scale[:, None, None] / jnp.maximum(lam, eps)            # [B, N, 3]
    alpha_b = alpha * scale                                           # [B]

    # per-gaussian precompute: Sigma = rho diag(lam_inv) rho^T, Sigma@mu, mu'Sigma mu
    rho_f = rho.astype(f32)
    mu3 = mu[..., 0].astype(f32)                                      # [B, N, 3]
    rho_l = rho_f * lam_inv[..., None, :]
    Sigma = jnp.einsum("bnik,bnjk->bnij", rho_l, rho_f)               # [B, N, 3, 3]
    sig_mu = jnp.einsum("bnij,bnj->bni", Sigma, mu3)                  # [B, N, 3]
    msm = jnp.einsum("bni,bni->bn", sig_mu, mu3)                      # [B, N]

    # packed, lane-dense parameter table [B, 24, N_pad]
    par = jnp.zeros((B, 24, N_pad), f32)
    par = par.at[:, 0, :N].set(Sigma[:, :, 0, 0])
    par = par.at[:, 1, :N].set(Sigma[:, :, 1, 1])
    par = par.at[:, 2, :N].set(Sigma[:, :, 2, 2])
    par = par.at[:, 3, :N].set(2.0 * Sigma[:, :, 0, 1])
    par = par.at[:, 4, :N].set(2.0 * Sigma[:, :, 0, 2])
    par = par.at[:, 5, :N].set(2.0 * Sigma[:, :, 1, 2])
    par = par.at[:, 8:11, :N].set(sig_mu.transpose(0, 2, 1))
    par = par.at[:, 23, :N].set(msm)
    # padded gaussians: zero weight (via zero appearance/ones columns) and very negative z
    par = par.at[:, 10, N:].set(PAD_MU_Z)

    # per-batch scalars via scalar prefetch (SMEM)
    a_coef_b = 0.5 * jnp.sqrt(jnp.pi * alpha_b)                       # [B]
    scal = jnp.stack([-1.0 / alpha_b, a_coef_b], axis=-1).astype(f32)  # [B, 2]

    # appearance^T with an all-ones row at index A (folds wsum into the matmul)
    appT = jnp.zeros((B, A_pad, N_pad), f32)
    appT = appT.at[:, :A, :N].set(appearance.transpose(0, 2, 1).astype(f32))
    appT = appT.at[:, A, :N].set(1.0)

    out = pl.pallas_call(
        partial(_render_kernel, A),
        out_shape=jax.ShapeDtypeStruct((B, A_pad, P_pad), f32),
        grid_spec=pltpu.PrefetchScalarGridSpec(
            num_scalar_prefetch=1,
            grid=(B, T, Kn),
            in_specs=[
                pl.BlockSpec((1, 16, tile_p), lambda b, t, k, s: (b, 0, t)),
                pl.BlockSpec((1, 24, n_tile), lambda b, t, k, s: (b, 0, k)),
                pl.BlockSpec((1, A_pad, n_tile), lambda b, t, k, s: (b, 0, k)),
            ],
            out_specs=pl.BlockSpec((1, A_pad, tile_p), lambda b, t, k, s: (b, 0, t)),
        ),
        compiler_params=pltpu.CompilerParams(
            dimension_semantics=("parallel", "parallel", "arbitrary"),
            vmem_limit_bytes=vmem_limit),
    )(scal, basis, par, appT)

    # ------ tiny XLA epilogue: background weight + normalization ------ #
    num = out[:, :A, :P]                                              # [B, A, P]
    wsum = out[:, A, :P]                                              # [B, P]
    zmax = out[:, A + 1, :P]                                          # [B, P]

    max_z = jnp.max(zmax, axis=-1)                                    # [B]
    z_bg = beta * max_z
    # background_integral: erfc-term clamped to [1,1] -> == max(a_coef, 0)
    w_bg = (1.0 / (1.0 + z_bg ** 4)) * jnp.maximum(a_coef_b, 0.0)     # [B]

    denom = jnp.maximum(wsum + w_bg[:, None], eps)                    # [B, P]
    bg = background_appearance[:, 0, :].astype(f32)                   # [B, A]
    img = (num + bg[:, :, None] * w_bg[:, None, None]) / denom[:, None, :]
    return img.reshape(B, A, H, W)                                    # NCHW [B, A, H, W]


# ------------------------- pure-JAX reference ------------------------------ #
def integral_raycasting_ref(pixels, mu, rho, lambd, appearance,
                            background_appearance, K,
                            alpha=0.025, beta=2.0, eps=EPS):
    B, N = mu.shape[0], mu.shape[1]
    H, W = pixels.shape[0], pixels.shape[1]
    rays = _compute_rays(pixels, K)                            # [B, H, W, 3]

    lam = lambd[..., 0]
    lmin = jnp.min(lam.reshape(B, -1), axis=-1)
    scale = 10.0 ** jnp.ceil(jnp.log10(jnp.maximum(lmin, 1e-6)))
    lam_inv = scale[:, None, None] / jnp.maximum(lam, eps)     # [B, N, 3]
    al = (alpha * scale)[:, None, None, None]                  # [B, 1, 1, 1]

    rho_rays = jnp.einsum("bnjk,bhwj->bhwnk", rho, rays)       # [B, H, W, N, 3]
    rho_mu = jnp.einsum("bnjk,bnj->bnk", rho, mu[..., 0])      # [B, N, 3]
    rsr = jnp.sum(lam_inv[:, None, None] * rho_rays ** 2, axis=-1)
    msm = jnp.sum(lam_inv * rho_mu ** 2, axis=-1)              # [B, N]
    rsm = jnp.sum(lam_inv[:, None, None] * rho_rays * rho_mu[:, None, None], axis=-1)

    z = rsm / jnp.maximum(rsr, eps)
    z_bg = beta * jnp.max(z.reshape(B, -1), axis=-1)           # [B]

    a = 0.5 * jnp.sqrt(jnp.pi * al)
    b = jnp.maximum(jnp.sqrt(jnp.maximum(rsr, 0.0)), eps)
    d = msm[:, None, None] - rsm ** 2 / jnp.maximum(rsr, eps)
    e = jnp.minimum(jnp.exp(jnp.minimum(-d / al, LOG10_INV_EPS)), 1.0 / eps)
    integ = jnp.maximum(a / b * e, 0.0)
    w = (1.0 / (1.0 + z ** 4)) * integ                         # [B, H, W, N]

    a_s = 0.5 * jnp.sqrt(jnp.pi * alpha * scale)
    w_bg = (1.0 / (1.0 + z_bg ** 4)) * jnp.maximum(a_s, 0.0)   # [B]
    w_all = jnp.concatenate(
        [w, jnp.broadcast_to(w_bg[:, None, None, None], (B, H, W, 1))], axis=-1)
    w_all = w_all / jnp.maximum(jnp.sum(w_all, axis=-1, keepdims=True), eps)
    app = jnp.concatenate([appearance, background_appearance], axis=1)  # [B, N+1, A]
    return jnp.einsum("bhwm,bma->bahw", w_all, app)


# --------------------------------- main ------------------------------------ #
if __name__ == "__main__":
    jax.config.update("jax_default_matmul_precision", "highest")

    H = W = 16
    B, N, A = 2, 8, 3

    key = jax.random.PRNGKey(0)
    k1, k2, k3, k4, k5, k6 = jax.random.split(key, 6)
    mu = jnp.concatenate(
        [jax.random.normal(k1, (B, N, 2, 1)) * 0.5,
         2.0 + 2.0 * jax.random.uniform(k2, (B, N, 1, 1))], axis=-2)   # [B, N, 3, 1]
    rho = jax.random.normal(k3, (B, N, 3, 3))
    lambd = 0.5 + 1.5 * jax.random.uniform(k4, (B, N, 3, 1))
    appearance = jax.random.uniform(k5, (B, N, A))
    background_appearance = jax.random.uniform(k6, (B, 1, A))
    fx = fy = 20.0
    K = jnp.broadcast_to(
        jnp.array([[fx, 0.0, W / 2.0], [0.0, fy, H / 2.0], [0.0, 0.0, 1.0]],
                  jnp.float32), (B, 3, 3))

    pixels = get_pixel_grid(H, W)                              # [H, W, 3, 1]

    out = integral_raycasting_pallas(pixels, mu, rho, lambd, appearance,
                                     background_appearance, K,
                                     alpha=0.025, beta=2.0)
    out = jax.block_until_ready(out)
    assert out.shape == (B, A, H, W)

    ref = integral_raycasting_ref(pixels, mu, rho, lambd, appearance,
                                  background_appearance, K,
                                  alpha=0.025, beta=2.0)
    np.testing.assert_allclose(np.asarray(out), np.asarray(ref),
                               rtol=1e-3, atol=1e-3)
    print("KERNEL_OK")
</pallas_src>

<mosaic_0001>
module attributes {stable_mosaic.version = 11 : i64} {
  func.func @_render_kernel(%arg0: i32, %arg1: i32, %arg2: i32, %arg3: memref<2x2xf32, #tpu.memory_space<smem>>, %arg4: memref<1x16x256xf32, #tpu.memory_space<vmem>>, %arg5: memref<1x24x8xf32, #tpu.memory_space<vmem>>, %arg6: memref<1x8x8xf32, #tpu.memory_space<vmem>>, %arg7: memref<1x8x256xf32, #tpu.memory_space<vmem>>) attributes {dimension_semantics = [#tpu.dimension_semantics<parallel>, #tpu.dimension_semantics<parallel>, #tpu.dimension_semantics<arbitrary>], iteration_bounds = array<i64: 2, 1, 1>, scalar_prefetch = 1 : i64, scratch_operands = 0 : i64, tpu.core_type = #tpu.core_type<tc>, window_params = [{transform_indices = @transform_0, window_bounds = array<i64: 1, 16, 256>}, {transform_indices = @transform_1, window_bounds = array<i64: 1, 24, 8>}, {transform_indices = @transform_2, window_bounds = array<i64: 1, 8, 8>}, {transform_indices = @transform_3, window_bounds = array<i64: 1, 8, 256>}]} {
    %0 = arith.index_cast %arg0 : i32 to index
    %c0 = arith.constant 0 : index
    %1 = memref.load %arg3[%0, %c0] : memref<2x2xf32, #tpu.memory_space<smem>>
    %2 = arith.index_cast %arg0 : i32 to index
    %c1 = arith.constant 1 : index
    %3 = memref.load %arg3[%2, %c1] : memref<2x2xf32, #tpu.memory_space<smem>>
    %c0_i32 = arith.constant 0 : i32
    %4 = arith.cmpi eq, %arg2, %c0_i32 : i32
    %5 = arith.extui %4 : i1 to i32
    %c0_i32_0 = arith.constant 0 : i32
    %6 = arith.cmpi ne, %5, %c0_i32_0 : i32
    scf.if %6 {
      %cst_40 = arith.constant 0.000000e+00 : f32
      %68 = vector.broadcast %cst_40 : f32 to vector<1x8x256xf32>
      %c0_41 = arith.constant 0 : index
      %c0_42 = arith.constant 0 : index
      %c0_43 = arith.constant 0 : index
      %69 = vector.load %arg7[%c0_41, %c0_42, %c0_43] : memref<1x8x256xf32, #tpu.memory_space<vmem>>, vector<1x8x256xf32>
      tpu.vector_store %arg7[%c0_41, %c0_42, %c0_43], %68 {strides = array<i32>} : memref<1x8x256xf32, #tpu.memory_space<vmem>>, vector<1x8x256xf32>,
      %cst_44 = arith.constant -3.000000e+38 : f32
      %70 = vector.broadcast %cst_44 : f32 to vector<1x256xf32>
      %c0_45 = arith.constant 0 : index
      %c4_46 = arith.constant 4 : index
      %c0_47 = arith.constant 0 : index
      %71 = vector.load %arg7[%c0_45, %c4_46, %c0_47] : memref<1x8x256xf32, #tpu.memory_space<vmem>>, vector<1x1x256xf32>
      %72 = vector.shape_cast %71 : vector<1x1x256xf32> to vector<1x256xf32>
      %73 = vector.shape_cast %70 : vector<1x256xf32> to vector<1x1x256xf32>
      tpu.vector_store %arg7[%c0_45, %c4_46, %c0_47], %73 {strides = array<i32>} : memref<1x8x256xf32, #tpu.memory_space<vmem>>, vector<1x1x256xf32>,
    } else {
    }
    %c0_1 = arith.constant 0 : index
    %c0_2 = arith.constant 0 : index
    %c0_3 = arith.constant 0 : index
    %7 = vector.load %arg5[%c0_1, %c0_2, %c0_3] : memref<1x24x8xf32, #tpu.memory_space<vmem>>, vector<1x8x8xf32>
    %8 = vector.shape_cast %7 : vector<1x8x8xf32> to vector<8x8xf32>
    %c0_4 = arith.constant 0 : index
    %c0_5 = arith.constant 0 : index
    %c0_6 = arith.constant 0 : index
    %9 = vector.load %arg4[%c0_4, %c0_5, %c0_6] : memref<1x16x256xf32, #tpu.memory_space<vmem>>, vector<1x8x256xf32>
    %10 = vector.shape_cast %9 : vector<1x8x256xf32> to vector<8x256xf32>
    %cst = arith.constant dense<0.000000e+00> : vector<8x256xf32>
    %11 = tpu.matmul %8, %10, %cst {dimension_numbers = #tpu.dot_dimension_numbers<[0], [0], [1], [1], [0, 1, 1, 1], [], []>, precision = #tpu.contract_precision<fp32>} : vector<8x8xf32>, vector<8x256xf32>, vector<8x256xf32> -> vector<8x256xf32>
    %c0_7 = arith.constant 0 : index
    %c8 = arith.constant 8 : index
    %c0_8 = arith.constant 0 : index
    %12 = vector.load %arg5[%c0_7, %c8, %c0_8] : memref<1x24x8xf32, #tpu.memory_space<vmem>>, vector<1x8x8xf32>
    %13 = vector.shape_cast %12 : vector<1x8x8xf32> to vector<8x8xf32>
    %c0_9 = arith.constant 0 : index
    %c8_10 = arith.constant 8 : index
    %c0_11 = arith.constant 0 : index
    %14 = vector.load %arg4[%c0_9, %c8_10, %c0_11] : memref<1x16x256xf32, #tpu.memory_space<vmem>>, vector<1x8x256xf32>
    %15 = vector.shape_cast %14 : vector<1x8x256xf32> to vector<8x256xf32>
    %cst_12 = arith.constant dense<0.000000e+00> : vector<8x256xf32>
    %16 = tpu.matmul %13, %15, %cst_12 {dimension_numbers = #tpu.dot_dimension_numbers<[0], [0], [1], [1], [0, 1, 1, 1], [], []>, precision = #tpu.contract_precision<fp32>} : vector<8x8xf32>, vector<8x256xf32>, vector<8x256xf32> -> vector<8x256xf32>
    %c0_13 = arith.constant 0 : index
    %c16 = arith.constant 16 : index
    %c0_14 = arith.constant 0 : index
    %17 = vector.load %arg5[%c0_13, %c16, %c0_14] : memref<1x24x8xf32, #tpu.memory_space<vmem>>, vector<1x8x8xf32>
    %18 = vector.shape_cast %17 : vector<1x8x8xf32> to vector<8x8xf32>
    %c0_15 = arith.constant 0 : index
    %c0_16 = arith.constant 0 : index
    %c0_17 = arith.constant 0 : index
    %19 = vector.load %arg4[%c0_15, %c0_16, %c0_17] : memref<1x16x256xf32, #tpu.memory_space<vmem>>, vector<1x8x256xf32>
    %20 = vector.shape_cast %19 : vector<1x8x256xf32> to vector<8x256xf32>
    %cst_18 = arith.constant dense<0.000000e+00> : vector<8x256xf32>
    %21 = tpu.matmul %18, %20, %cst_18 {dimension_numbers = #tpu.dot_dimension_numbers<[0], [0], [1], [1], [0, 1, 1, 1], [], []>, precision = #tpu.contract_precision<fp32>} : vector<8x8xf32>, vector<8x256xf32>, vector<8x256xf32> -> vector<8x256xf32>
    %cst_19 = arith.constant 9.99999993E-9 : f32
    %22 = vector.broadcast %cst_19 : f32 to vector<8x256xf32>
    %23 = arith.maximumf %11, %22 : vector<8x256xf32>
    %24 = tpu.reciprocal %23 {approx = true} : vector<8x256xf32> -> vector<8x256xf32>
    %25 = arith.mulf %23, %24 : vector<8x256xf32>
    %cst_20 = arith.constant 2.000000e+00 : f32
    %26 = vector.broadcast %cst_20 : f32 to vector<8x256xf32>
    %27 = arith.subf %26, %25 : vector<8x256xf32>
    %28 = arith.mulf %24, %27 : vector<8x256xf32>
    %29 = arith.mulf %16, %28 : vector<8x256xf32>
    %cst_21 = arith.constant dense<0xFF800000> : vector<256xf32>
    %30 = vector.multi_reduction <maximumf>, %29, %cst_21 [0] : vector<8x256xf32> to vector<256xf32>
    %31 = vector.shape_cast %30 : vector<256xf32> to vector<1x256xf32>
    %c0_22 = arith.constant 0 : index
    %c4 = arith.constant 4 : index
    %c0_23 = arith.constant 0 : index
    %32 = vector.load %arg7[%c0_22, %c4, %c0_23] : memref<1x8x256xf32, #tpu.memory_space<vmem>>, vector<1x1x256xf32>
    %33 = vector.shape_cast %32 : vector<1x1x256xf32> to vector<1x256xf32>
    %34 = arith.maximumf %33, %31 : vector<1x256xf32>
    %c0_24 = arith.constant 0 : index
    %c4_25 = arith.constant 4 : index
    %c0_26 = arith.constant 0 : index
    %35 = vector.load %arg7[%c0_24, %c4_25, %c0_26] : memref<1x8x256xf32, #tpu.memory_space<vmem>>, vector<1x1x256xf32>
    %36 = vector.shape_cast %35 : vector<1x1x256xf32> to vector<1x256xf32>
    %37 = vector.shape_cast %34 : vector<1x256xf32> to vector<1x1x256xf32>
    tpu.vector_store %arg7[%c0_24, %c4_25, %c0_26], %37 {strides = array<i32>} : memref<1x8x256xf32, #tpu.memory_space<vmem>>, vector<1x1x256xf32>,
    %38 = arith.mulf %29, %29 : vector<8x256xf32>
    %39 = arith.mulf %38, %38 : vector<8x256xf32>
    %cst_27 = arith.constant 1.000000e+00 : f32
    %40 = vector.broadcast %cst_27 : f32 to vector<8x256xf32>
    %41 = arith.addf %40, %39 : vector<8x256xf32>
    %cst_28 = arith.constant 1.000000e-16 : f32
    %42 = vector.broadcast %cst_28 : f32 to vector<8x256xf32>
    %43 = arith.maximumf %11, %42 : vector<8x256xf32>
    %44 = arith.mulf %41, %41 : vector<8x256xf32>
    %45 = arith.mulf %43, %44 : vector<8x256xf32>
    %46 = math.rsqrt %45 : vector<8x256xf32>
    %47 = arith.mulf %21, %23 : vector<8x256xf32>
    %48 = arith.mulf %16, %16 : vector<8x256xf32>
    %49 = arith.subf %47, %48 : vector<8x256xf32>
    %50 = arith.mulf %49, %28 : vector<8x256xf32>
    %51 = vector.broadcast %1 : f32 to vector<8x256xf32>
    %52 = arith.mulf %50, %51 : vector<8x256xf32>
    %cst_29 = arith.constant 8.000000e+00 : f32
    %53 = vector.broadcast %cst_29 : f32 to vector<8x256xf32>
    %54 = arith.minimumf %52, %53 : vector<8x256xf32>
    %55 = math.exp %54 : vector<8x256xf32>
    %56 = vector.broadcast %3 : f32 to vector<8x256xf32>
    %57 = arith.mulf %56, %55 : vector<8x256xf32>
    %58 = arith.mulf %57, %46 : vector<8x256xf32>
    %c0_30 = arith.constant 0 : index
    %c0_31 = arith.constant 0 : index
    %c0_32 = arith.constant 0 : index
    %59 = vector.load %arg6[%c0_30, %c0_31, %c0_32] : memref<1x8x8xf32, #tpu.memory_space<vmem>>, vector<1x8x8xf32>
    %60 = vector.shape_cast %59 : vector<1x8x8xf32> to vector<8x8xf32>
    %cst_33 = arith.constant dense<0.000000e+00> : vector<8x256xf32>
    %61 = tpu.matmul %60, %58, %cst_33 {dimension_numbers = #tpu.dot_dimension_numbers<[1], [0], [0], [1], [0, 0, 1, 1], [], []>, precision = #tpu.contract_precision<fp32>} : vector<8x8xf32>, vector<8x256xf32>, vector<8x256xf32> -> vector<8x256xf32>
    %c0_34 = arith.constant 0 : index
    %c0_35 = arith.constant 0 : index
    %c0_36 = arith.constant 0 : index
    %62 = vector.load %arg7[%c0_34, %c0_35, %c0_36] : memref<1x8x256xf32, #tpu.memory_space<vmem>>, vector<1x8x256xf32>
    %63 = vector.shape_cast %62 : vector<1x8x256xf32> to vector<8x256xf32>
    %64 = arith.addf %63, %61 : vector<8x256xf32>
    %c0_37 = arith.constant 0 : index
    %c0_38 = arith.constant 0 : index
    %c0_39 = arith.constant 0 : index
    %65 = vector.load %arg7[%c0_37, %c0_38, %c0_39] : memref<1x8x256xf32, #tpu.memory_space<vmem>>, vector<1x8x256xf32>
    %66 = vector.shape_cast %65 : vector<1x8x256xf32> to vector<8x256xf32>
    %67 = vector.shape_cast %64 : vector<8x256xf32> to vector<1x8x256xf32>
    tpu.vector_store %arg7[%c0_37, %c0_38, %c0_39], %67 {strides = array<i32>} : memref<1x8x256xf32, #tpu.memory_space<vmem>>, vector<1x8x256xf32>,
    return
  }
  func.func @transform_0(%arg0: i32, %arg1: i32, %arg2: i32, %arg3: memref<2x2xf32, #tpu.memory_space<smem>>) -> (i32, i32, i32) {
    %c0_i32 = arith.constant 0 : i32
    %c0_i32_0 = arith.constant 0 : i32
    return %arg0, %c0_i32, %arg1 : i32, i32, i32
  }
  func.func @transform_1(%arg0: i32, %arg1: i32, %arg2: i32, %arg3: memref<2x2xf32, #tpu.memory_space<smem>>) -> (i32, i32, i32) {
    %c0_i32 = arith.constant 0 : i32
    %c0_i32_0 = arith.constant 0 : i32
    return %arg0, %c0_i32, %arg2 : i32, i32, i32
  }
  func.func @transform_2(%arg0: i32, %arg1: i32, %arg2: i32, %arg3: memref<2x2xf32, #tpu.memory_space<smem>>) -> (i32, i32, i32) {
    %c0_i32 = arith.constant 0 : i32
    %c0_i32_0 = arith.constant 0 : i32
    return %arg0, %c0_i32, %arg2 : i32, i32, i32
  }
  func.func @transform_3(%arg0: i32, %arg1: i32, %arg2: i32, %arg3: memref<2x2xf32, #tpu.memory_space<smem>>) -> (i32, i32, i32) {
    %c0_i32 = arith.constant 0 : i32
    %c0_i32_0 = arith.constant 0 : i32
    return %arg0, %c0_i32, %arg1 : i32, i32, i32
  }
}

</mosaic_0001>

<llo_original>
// kernel: tpu_custom_call.1
$region0: #{tpu_custom_call.1}
  #allocation0 [shape = 'u32[]', space=smem, size = 0x4, offset = 0x4, fixed_abs, tag = 'smem constant byte address 0x4 - core index']
  #allocation1 [shape = 'u32[72,128]{1,0:T(1,128)}', space=vmem, size = 0x9000, scoped, tag = 'internal scratch']
  #allocation2 [shape = 's32[1]{0}', space=sflag, size = 0x4, scoped, tag = 'scoped memory for tpu_custom_call.1']
  #allocation3 [shape = 'u8[1024]{0}', space=smem, size = 0x400, scoped, tag = 'prefetched SMEM operand 0']
  %s0 = inlined_call_operand.hbm [shape: f32[2,2], index: 0, kind: input, shape index: {}]
  %s1 = inlined_call_operand.vmem [shape: f32[2,16,256], index: 1, kind: input, shape index: {}]
  %s2 = inlined_call_operand.vmem [shape: f32[2,24,8], index: 2, kind: input, shape index: {}]
  %s3 = inlined_call_operand.hbm [shape: f32[2,8,8], index: 3, kind: input, shape index: {}]
  %s4 = inlined_call_operand.hbm [shape: f32[2,8,256], index: 4, kind: output, shape index: {}]
  %s5 = sld [smem:[#allocation0]]
  $region53: #{tpu_custom_call.1} parent=0
    _
  %s7 = ssub.s32 1, %s5
  %s8 = scalar_select 0, %s7, %s5
  %s10 = sshll.u32 %s0, 4
  %s11 = int_to_ptr.hbm [resolvable:$true] %s10
  %13 = dma.hbm_to_smem %s11, 32, [#allocation3], [#allocation2]
  %15 = dma.done [#allocation2], 32
  %16 = sfence
  $region1: #{tpu_custom_call.1} parent=0
    #allocation4 [shape = 'u8[8192]{0}', space=vmem, size = 0x2000, scoped, tag = 'input window, operand 3']
    #allocation5 [shape = 's32[2]{0}', space=sflag, size = 0x8, scoped, tag = 'scoped memory for tpu_custom_call.1']
    #allocation6 [shape = 's32[2]{0}', space=sflag, size = 0x8, scoped, tag = 'scoped memory for tpu_custom_call.1']
    #allocation7 [shape = 'u8[16384]{0}', space=vmem, size = 0x4000, scoped, tag = 'output window, operand 0']
    %17 = vsyncpa [#allocation5], 0
    %s18 = scalar_lea.sflag [#allocation5], 1
    %19 = vsyncpa %s18, 0
    %20 = vsyncpa [#allocation6], 0
    %s21 = scalar_lea.sflag [#allocation6], 1
    %22 = vsyncpa %s21, 0
    loop: start=0, step=1, limit=4
    $region2: #{tpu_custom_call.1} parent=1 // loop_pre_header
      _
    $region3: #{tpu_custom_call.1} parent=1 // loop_header
      %s24 = sphi 0, %s28
      %p25 = scmp.ge.s32.totalorder %s24, 4
      %s31 = sphi 0, %s50
      %s32 = sphi 0, %s46
      %s33 = sphi 0, %s42
      %s34 = sphi 0, %s31
      %s35 = sphi 0, %s32
      %s36 = sphi 0, %s33
      %s37 = sphi 0, %s34
      %s38 = sphi 0, %s35
      %s39 = sphi 0, %s36
      %s55 = sphi 0, %s57
      %s58 = sphi 0, %s55
      %s59 = sphi 0, %s58
      %s75 = sphi 0, %s59
      %s83 = sphi 0, %s85
      %s86 = sphi 0, %s83
      %s87 = sphi 0, %s86
      %s103 = sphi 0, %s87
      %s111 = sphi 0, %s113
      %s114 = sphi 0, %s111
      %s115 = sphi 0, %s114
      %s131 = sphi 0, %s115
      %s139 = sphi 0, %s141
      %s142 = sphi 0, %s139
      %s143 = sphi 0, %s142
      %s159 = sphi 0, %s143
    $region4: #{tpu_custom_call.1} parent=1 // loop_header_branch
      %27 = sbr.rel (%p25) target = $region8
    $region5: #{tpu_custom_call.1} parent=1 // loop_body
      %s29 = ssub.s32 %s24, 1
      %s30 = ssub.s32 %s24, 2
      %s40 = sadd.s32 1, %s33
      %p41 = scmp.ge.s32.totalorder %s40, 1
      %s42 = scalar_select %p41, 0, %s40
      %s43 = sadd.s32 1, %s32
      %s44 = scalar_select %p41, %s43, %s32
      %p45 = scmp.ge.s32.totalorder %s44, 1
      %s46 = scalar_select %p45, 0, %s44
      %s47 = sadd.s32 1, %s31
      %s48 = scalar_select %p45, %s47, %s31
      %p49 = scmp.ge.s32.totalorder %s48, 2
      %s50 = scalar_select %p49, 0, %s48
      %s51 = ssub.s32 %s31, %s50
      %s52 = ssub.s32 %s32, %s46
      %s53 = sor.u32 %s51, %s52
      %p54 = scmp.eq.s32.totalorder %s53, 0
      %s56 = sadd.s32 %s55, 1
      %s57 = scalar_select %p54, %s55, %s56
      %p60 = pneg %p54
      %p61 = scmp.eq.s32.totalorder %s24, 1
      %p62 = por %p60, %p61
      %p63 = scmp.ne.s32.totalorder %s55, %s58
      %p64 = scmp.eq.s32.totalorder %s24, 0
      %p65 = por %p63, %p64
      %p66 = scmp.ne.s32.totalorder %s55, %s58
      %p67 = scmp.eq.s32.totalorder %s29, 1
      %p68 = por %p66, %p67
      %p69 = scmp.ne.s32.totalorder %s58, %s59
      %p70 = scmp.eq.s32.totalorder %s29, 0
      %p71 = por %p69, %p70
      %p72 = scmp.ne.s32.totalorder %s58, %s59
      %p73 = scmp.eq.s32.totalorder %s30, 1
      %p74 = por %p72, %p73
      %p76 = scmp.ne.s32.totalorder %s59, %s75
      %p77 = scmp.eq.s32.totalorder %s30, 0
      %p78 = por %p76, %p77
      %s79 = ssub.s32 %s31, %s50
      %s80 = ssub.s32 %s33, %s42
      %s81 = sor.u32 %s79, %s80
      %p82 = scmp.eq.s32.totalorder %s81, 0
      %s84 = sadd.s32 %s83, 1
      %s85 = scalar_select %p82, %s83, %s84
      %p88 = pneg %p82
      %p89 = scmp.eq.s32.totalorder %s24, 1
      %p90 = por %p88, %p89
      %p91 = scmp.ne.s32.totalorder %s83, %s86
      %p92 = scmp.eq.s32.totalorder %s24, 0
      %p93 = por %p91, %p92
      %p94 = scmp.ne.s32.totalorder %s83, %s86
      %p95 = scmp.eq.s32.totalorder %s29, 1
      %p96 = por %p94, %p95
      %p97 = scmp.ne.s32.totalorder %s86, %s87
      %p98 = scmp.eq.s32.totalorder %s29, 0
      %p99 = por %p97, %p98
      %p100 = scmp.ne.s32.totalorder %s86, %s87
      %p101 = scmp.eq.s32.totalorder %s30, 1
      %p102 = por %p100, %p101
      %p104 = scmp.ne.s32.totalorder %s87, %s103
      %p105 = scmp.eq.s32.totalorder %s30, 0
      %p106 = por %p104, %p105
      %s107 = ssub.s32 %s31, %s50
      %s108 = ssub.s32 %s33, %s42
      %s109 = sor.u32 %s107, %s108
      %p110 = scmp.eq.s32.totalorder %s109, 0
      %s112 = sadd.s32 %s111, 1
      %s113 = scalar_select %p110, %s111, %s112
      %p116 = pneg %p110
      %p117 = scmp.eq.s32.totalorder %s24, 1
      %p118 = por %p116, %p117
      %p119 = scmp.ne.s32.totalorder %s111, %s114
      %p120 = scmp.eq.s32.totalorder %s24, 0
      %p121 = por %p119, %p120
      %p122 = scmp.ne.s32.totalorder %s111, %s114
      %p123 = scmp.eq.s32.totalorder %s29, 1
      %p124 = por %p122, %p123
      %p125 = scmp.ne.s32.totalorder %s114, %s115
      %p126 = scmp.eq.s32.totalorder %s29, 0
      %p127 = por %p125, %p126
      %p128 = scmp.ne.s32.totalorder %s114, %s115
      %p129 = scmp.eq.s32.totalorder %s30, 1
      %p130 = por %p128, %p129
      %p132 = scmp.ne.s32.totalorder %s115, %s131
      %p133 = scmp.eq.s32.totalorder %s30, 0
      %p134 = por %p132, %p133
      %s135 = ssub.s32 %s31, %s50
      %s136 = ssub.s32 %s32, %s46
      %s137 = sor.u32 %s135, %s136
      %p138 = scmp.eq.s32.totalorder %s137, 0
      %s140 = sadd.s32 %s139, 1
      %s141 = scalar_select %p138, %s139, %s140
      %p144 = pneg %p138
      %p145 = scmp.eq.s32.totalorder %s24, 1
      %p146 = por %p144, %p145
      %p147 = scmp.ne.s32.totalorder %s139, %s142
      %p148 = scmp.eq.s32.totalorder %s24, 0
      %p149 = por %p147, %p148
      %p150 = scmp.ne.s32.totalorder %s139, %s142
      %p151 = scmp.eq.s32.totalorder %s29, 1
      %p152 = por %p150, %p151
      %p153 = scmp.ne.s32.totalorder %s142, %s143
      %p154 = scmp.eq.s32.totalorder %s29, 0
      %p155 = por %p153, %p154
      %p156 = scmp.ne.s32.totalorder %s142, %s143
      %p157 = scmp.eq.s32.totalorder %s30, 1
      %p158 = por %p156, %p157
      %p160 = scmp.ne.s32.totalorder %s143, %s159
      %p161 = scmp.eq.s32.totalorder %s30, 0
      %p162 = por %p160, %p161
      %p163 = scmp.le.s32.totalorder 1, %s24
      %p164 = scmp.lt.s32.totalorder %s24, 3
      %p165 = pnand %p163, %p164
      %p166 = pneg %p165
      // Predicated region
      $region9: #{tpu_custom_call.1} parent=5 // pred_check
        _
      $region10: #{tpu_custom_call.1} parent=5 // pred_check_branch
        %168 = sbr.rel (%p165) target = $region12
      $region11: #{tpu_custom_call.1} parent=5 // pred_region
        %s169 = ssub.s32 %s24, 1
      $region12: #{tpu_custom_call.1} parent=5 // pred_fallthru
        _
      %p170 = scmp.lt.s32.totalorder %s24, 2
      // Predicated region
      $region13: #{tpu_custom_call.1} parent=5 // pred_check
        %p171 = pneg %p170
      $region14: #{tpu_custom_call.1} parent=5 // pred_check_branch
        %173 = sbr.rel (%p171) target = $region16
      $region15: #{tpu_custom_call.1} parent=5 // pred_region
        // Predicated region
        $region17: #{tpu_custom_call.1} parent=15 // pred_check
          %p174 = pneg %p65
        $region18: #{tpu_custom_call.1} parent=15 // pred_check_branch
          %176 = sbr.rel (%p174) target = $region20
        $region19: #{tpu_custom_call.1} parent=15 // pred_region
          %s177 = smul.u32 2, %s32
          %p178 = scmp.lt.s32.totalorder %s31, 1
          %s179 = scalar_select %p178, %s31, 1
          %p180 = scmp.lt.s32.totalorder %s177, 1
          %s181 = scalar_select %p180, %s177, 1
          %s182 = smul.addr %s179, 4
          %s183 = sadd.s32 %s181, %s182
          %s184 = smul.addr %s183, 8
          %s185 = scalar_lea.vmem %s1, %s184
          %s186 = smul.u32 2, %s32
        $region20: #{tpu_custom_call.1} parent=15 // pred_fallthru
          _
        // Predicated region
        $region21: #{tpu_custom_call.1} parent=15 // pred_check
          %p187 = pneg %p93
        $region22: #{tpu_custom_call.1} parent=15 // pred_check_branch
          %189 = sbr.rel (%p187) target = $region24
        $region23: #{tpu_custom_call.1} parent=15 // pred_region
          %p190 = scmp.lt.s32.totalorder %s31, 1
          %s191 = scalar_select %p190, %s31, 1
          %p192 = scmp.lt.s32.totalorder %s33, 0
          %s193 = scalar_select %p192, %s33, 0
          %s194 = smul.addr %s191, 3
          %s195 = sadd.s32 %s193, %s194
          %s196 = smul.addr %s195, 8
          %s197 = scalar_lea.vmem %s2, %s196
        $region24: #{tpu_custom_call.1} parent=15 // pred_fallthru
          _
        // Predicated region
        $region25: #{tpu_custom_call.1} parent=15 // pred_check
          %p198 = pneg %p121
        $region26: #{tpu_custom_call.1} parent=15 // pred_check_branch
          %200 = sbr.rel (%p198) target = $region28
        $region27: #{tpu_custom_call.1} parent=15 // pred_region
          %s201 = sand.u32 %s111, 1
          %s202 = scalar_lea.sflag [#allocation5], %s201
          %s203 = sand.u32 %s111, 1
          %s204 = smul.addr %s203, 8
          %s205 = scalar_lea.vmem [#allocation4], %s204
          %207 = vsyncadd %s202, 0
          %s208 = sadd.s32 %s33, %s31
          %s209 = smul.addr %s208, 8
          %s210 = scalar_lea.hbm %s3, %s209
          %s212 = sshll.u32 %s210, 4
          %s213 = int_to_ptr.hbm [resolvable:$true] %s212
          %s214 = sshll.u32 %s205, 4
          %s215 = int_to_ptr.vmem [resolvable:$true] %s214
          %217 = dma.hbm_to_vmem [thread:$0]  %s213, 128, %s215, %s202
        $region28: #{tpu_custom_call.1} parent=15 // pred_fallthru
          _
      $region16: #{tpu_custom_call.1} parent=5 // pred_fallthru
        _
      %p218 = scmp.le.s32.totalorder 1, %s24
      %p219 = scmp.lt.s32.totalorder %s24, 3
      %p220 = pnand %p218, %p219
      %p221 = pneg %p220
      // Predicated region
      $region29: #{tpu_custom_call.1} parent=5 // pred_check
        _
      $region30: #{tpu_custom_call.1} parent=5 // pred_check_branch
        %223 = sbr.rel (%p220) target = $region32
      $region31: #{tpu_custom_call.1} parent=5 // pred_region
        %s224 = ssub.s32 %s24, 1
        %s225 = sand.u32 %s114, 1
        %s226 = scalar_lea.sflag [#allocation5], %s225
        %s227 = sand.u32 %s114, 1
        %s228 = smul.addr %s227, 8
        %s229 = scalar_lea.vmem [#allocation4], %s228
        // Predicated region
        $region33: #{tpu_custom_call.1} parent=31 // pred_check
          %p230 = pneg %p127
        $region34: #{tpu_custom_call.1} parent=31 // pred_check_branch
          %232 = sbr.rel (%p230) target = $region36
        $region35: #{tpu_custom_call.1} parent=31 // pred_region
          %234 = dma.done %s226, 128
        $region36: #{tpu_custom_call.1} parent=31 // pred_fallthru
          _
        %s235 = smul.u32 2, %s35
        %p236 = scmp.lt.s32.totalorder %s34, 1
        %s237 = scalar_select %p236, %s34, 1
        %p238 = scmp.lt.s32.totalorder %s235, 1
        %s239 = scalar_select %p238, %s235, 1
        %s240 = smul.addr %s237, 4
        %s241 = sadd.s32 %s239, %s240
        %s242 = smul.addr %s241, 8
        %s243 = scalar_lea.vmem %s1, %s242
        %p244 = pneg %p71
        %p245 = pneg %p68
        %p246 = scmp.lt.s32.totalorder %s34, 1
        %s247 = scalar_select %p246, %s34, 1
        %p248 = scmp.lt.s32.totalorder %s36, 0
        %s249 = scalar_select %p248, %s36, 0
        %s250 = smul.addr %s247, 3
        %s251 = sadd.s32 %s249, %s250
        %s252 = smul.addr %s251, 8
        %s253 = scalar_lea.vmem %s2, %s252
        %p254 = pneg %p99
        %p255 = pneg %p96
        %s256 = sand.u32 %s114, 1
        %s257 = scalar_lea.sflag [#allocation5], %s256
        %s258 = sand.u32 %s114, 1
        %s259 = smul.addr %s258, 8
        %s260 = scalar_lea.vmem [#allocation4], %s259
        %p261 = pneg %p127
        %p262 = pneg %p124
        %p263 = pneg %p155
        %p264 = pneg %p152
        %s265 = sand.u32 %s142, 1
        %s266 = scalar_lea.sflag [#allocation6], %s265
        %s267 = sand.u32 %s142, 1
        %s268 = smul.addr %s267, 16
        %s269 = scalar_lea.vmem [#allocation7], %s268
        %s270 = smul.u32 2, %s35
        %p271 = scmp.lt.s32.totalorder %s34, 1
        %s272 = scalar_select %p271, %s34, 1
        %p273 = scmp.lt.s32.totalorder %s270, 1
        %s274 = scalar_select %p273, %s270, 1
        %s275 = smul.addr %s272, 4
        %s276 = sadd.s32 %s274, %s275
        %s277 = smul.addr %s276, 8
        %s278 = scalar_lea.vmem %s1, %s277
        %s279 = smul.u32 2, %s35
        %p280 = scmp.lt.s32.totalorder %s34, 1
        %s281 = scalar_select %p280, %s34, 1
        %p282 = scmp.lt.s32.totalorder %s36, 0
        %s283 = scalar_select %p282, %s36, 0
        %s284 = smul.addr %s281, 3
        %s285 = sadd.s32 %s283, %s284
        %s286 = smul.addr %s285, 8
        %s287 = scalar_lea.vmem %s2, %s286
        %s288 = smul.u32 2, %s35
        %s289 = smul.u32 %s34, 128
        %s290 = sld [smem:[#allocation3 + %s289]]
        %s291 = sadd.s32 %s289, 1
        %s292 = sld [smem:[#allocation3 + %s291]]
        %p293 = scmp.eq.s32.totalorder %s36, 0
        // Predicated region
        $region37: #{tpu_custom_call.1} parent=31 // pred_check
          %p294 = pneg %p293
        $region38: #{tpu_custom_call.1} parent=31 // pred_check_branch
          %296 = sbr.rel (%p294) target = $region40
        $region39: #{tpu_custom_call.1} parent=31 // pred_region
          %297 = vst [vmem:[%s269] sm:$0xff] 0.0
          %298 = vst [vmem:[%s269 + $0x8] sm:$0xff] 0.0
          %v299 = vlaneseq
          %vm300 = vcmp.ge.s32.totalorder %v299, 0
          %vm301 = vcmp.lt.s32.totalorder %v299, 256
          %vm302 = vmand %vm300, %vm301
          %s303 = scalar_lea.vmem %s269, 4 [#allocation7]
          %304 = vst.msk [vmem:[%s303] ss:$8 sm:$0x3] %vm302, -3e+38
          %305 = vst.msk [vmem:[%s303] ss:$8 sm:$0x0] %vm302, -3e+38
        $region40: #{tpu_custom_call.1} parent=31 // pred_fallthru
          _
        %v306 = vld [vmem:[%s287] sm:$0xff]
        %v307 = vld [vmem:[%s278] sm:$0xff]
        %v308 = vld [vmem:[%s278 + $0x8] sm:$0xff]
        %309 = vxpose.xlu0.b32.start [1/16] %v306, 128
        %310 = vxpose.xlu0.b32.cont [2/16] 0.0, 128
        %311 = vxpose.xlu0.b32.cont [3/16] 0.0, 128
        %312 = vxpose.xlu0.b32.cont [4/16] 0.0, 128
        %313 = vxpose.xlu0.b32.cont [5/16] 0.0, 128
        %314 = vxpose.xlu0.b32.cont [6/16] 0.0, 128
        %315 = vxpose.xlu0.b32.cont [7/16] 0.0, 128
        %316 = vxpose.xlu0.b32.cont [8/16] 0.0, 128
        %317 = vxpose.xlu0.b32.cont [9/16] 0.0, 128
        %318 = vxpose.xlu0.b32.cont [10/16] 0.0, 128
        %319 = vxpose.xlu0.b32.cont [11/16] 0.0, 128
        %320 = vxpose.xlu0.b32.cont [12/16] 0.0, 128
        %321 = vxpose.xlu0.b32.cont [13/16] 0.0, 128
        %322 = vxpose.xlu0.b32.cont [14/16] 0.0, 128
        %323 = vxpose.xlu0.b32.cont [15/16] 0.0, 128
        %324 = vxpose.xlu0.b32.end [16/16] 0.0, 128
        %v325 = vpop.trf.xlu0
        %v326 = vpop.trf.xlu0
        %v327 = vpop.trf.xlu0
        %v328 = vpop.trf.xlu0
        %v329 = vpop.trf.xlu0
        %v330 = vpop.trf.xlu0
        %v331 = vpop.trf.xlu0
        %v332 = vpop.trf.xlu0
        %v333 = vpop.trf.xlu0
        %v334 = vpop.trf.xlu0
        %v335 = vpop.trf.xlu0
        %v336 = vpop.trf.xlu0
        %v337 = vpop.trf.xlu0
        %v338 = vpop.trf.xlu0
        %v339 = vpop.trf.xlu0
        %v340 = vpop.trf.xlu0
        %vm341 = vcmask 64512
        %v343 = vsel %vm341, %v325, 0
        %345 = vmatpush.msra.mxu0 0.0
        %346 = vmatpush.msra.mxu0 0.0
        %347 = vmatpush.msra.mxu0 0.0
        %348 = vmatpush.msra.mxu0 0.0
        %349 = vmatpush.msra.mxu0 0.0
        %350 = vmatpush.msra.mxu0 0.0
        %351 = vmatpush.msra.mxu0 0.0
        %352 = vmatpush.msra.mxu0 0.0
        %353 = vmatpush.msra.mxu0 0.0
        %354 = vmatpush.msra.mxu0 0.0
        %355 = vmatpush.msra.mxu0 0.0
        %356 = vmatpush.msra.mxu0 0.0
        %357 = vmatpush.msra.mxu0 0.0
        %358 = vmatpush.msra.mxu0 0.0
        %359 = vmatpush.msra.mxu0 0.0
        %v360 = vand.u32 %v307, 4294901760
        %361 = vmatpush.msra.mxu0 %v360
        %v362 = vand.u32 %v343, 4294901760
        %v363 = vsub.f32 %v343, %v362
        %v364 = vand.u32 %v363, 4294901760
        %v365 = vsub.f32 %v363, %v364
        %v366 = vand.u32 %v365, 4294901760
        %367 = vmatmul.f32.gmra.mxu0 %v366
        %v368 = vpop.f32.mrf.mxu0
        %v369 = vadd.f32 0.0, %v368
        %370 = vdwg.mxu0
        %371 = vmatpush.msra.mxu0 0.0
        %372 = vmatpush.msra.mxu0 0.0
        %373 = vmatpush.msra.mxu0 0.0
        %374 = vmatpush.msra.mxu0 0.0
        %375 = vmatpush.msra.mxu0 0.0
        %376 = vmatpush.msra.mxu0 0.0
        %377 = vmatpush.msra.mxu0 0.0
        %378 = vmatpush.msra.mxu0 0.0
        %379 = vmatpush.msra.mxu0 0.0
        %380 = vmatpush.msra.mxu0 0.0
        %381 = vmatpush.msra.mxu0 0.0
        %382 = vmatpush.msra.mxu0 0.0
        %383 = vmatpush.msra.mxu0 0.0
        %384 = vmatpush.msra.mxu0 0.0
        %385 = vmatpush.msra.mxu0 0.0
        %v386 = vand.u32 %v307, 4294901760
        %v387 = vsub.f32 %v307, %v386
        %v388 = vand.u32 %v387, 4294901760
        %v389 = vsub.f32 %v387, %v388
        %v390 = vand.u32 %v389, 4294901760
        %391 = vmatpush.msra.mxu0 %v390
        %v392 = vand.u32 %v343, 4294901760
        %393 = vmatmul.f32.gmra.mxu0 %v392
        %v394 = vpop.f32.mrf.mxu0
        %v395 = vadd.f32 %v369, %v394
        %396 = vdwg.mxu0
        %397 = vmatpush.msra.mxu0 0.0
        %398 = vmatpush.msra.mxu0 0.0
        %399 = vmatpush.msra.mxu0 0.0
        %400 = vmatpush.msra.mxu0 0.0
        %401 = vmatpush.msra.mxu0 0.0
        %402 = vmatpush.msra.mxu0 0.0
        %403 = vmatpush.msra.mxu0 0.0
        %404 = vmatpush.msra.mxu0 0.0
        %405 = vmatpush.msra.mxu0 0.0
        %406 = vmatpush.msra.mxu0 0.0
        %407 = vmatpush.msra.mxu0 0.0
        %408 = vmatpush.msra.mxu0 0.0
        %409 = vmatpush.msra.mxu0 0.0
        %410 = vmatpush.msra.mxu0 0.0
        %411 = vmatpush.msra.mxu0 0.0
        %v412 = vand.u32 %v307, 4294901760
        %v413 = vsub.f32 %v307, %v412
        %414 = vmatpush.msra.mxu0 %v413
        %v415 = vand.u32 %v343, 4294901760
        %v416 = vsub.f32 %v343, %v415
        %417 = vmatmul.f32.gmra.mxu0 %v416
        %v418 = vpop.f32.mrf.mxu0
        %v419 = vadd.f32 %v395, %v418
        %420 = vdwg.mxu0
        %421 = vmatpush.msra.mxu0 0.0
        %422 = vmatpush.msra.mxu0 0.0
        %423 = vmatpush.msra.mxu0 0.0
        %424 = vmatpush.msra.mxu0 0.0
        %425 = vmatpush.msra.mxu0 0.0
        %426 = vmatpush.msra.mxu0 0.0
        %427 = vmatpush.msra.mxu0 0.0
        %428 = vmatpush.msra.mxu0 0.0
        %429 = vmatpush.msra.mxu0 0.0
        %430 = vmatpush.msra.mxu0 0.0
        %431 = vmatpush.msra.mxu0 0.0
        %432 = vmatpush.msra.mxu0 0.0
        %433 = vmatpush.msra.mxu0 0.0
        %434 = vmatpush.msra.mxu0 0.0
        %435 = vmatpush.msra.mxu0 0.0
        %v436 = vand.u32 %v307, 4294901760
        %437 = vmatpush.msra.mxu0 %v436
        %v438 = vand.u32 %v343, 4294901760
        %v439 = vsub.f32 %v343, %v438
        %v440 = vand.u32 %v439, 4294901760
        %441 = vmatmul.f32.gmra.mxu0 %v440
        %v442 = vpop.f32.mrf.mxu0
        %v443 = vadd.f32 %v419, %v442
        %444 = vdwg.mxu0
        %445 = vmatpush.msra.mxu0 0.0
        %446 = vmatpush.msra.mxu0 0.0
        %447 = vmatpush.msra.mxu0 0.0
        %448 = vmatpush.msra.mxu0 0.0
        %449 = vmatpush.msra.mxu0 0.0
        %450 = vmatpush.msra.mxu0 0.0
        %451 = vmatpush.msra.mxu0 0.0
        %452 = vmatpush.msra.mxu0 0.0
        %453 = vmatpush.msra.mxu0 0.0
        %454 = vmatpush.msra.mxu0 0.0
        %455 = vmatpush.msra.mxu0 0.0
        %456 = vmatpush.msra.mxu0 0.0
        %457 = vmatpush.msra.mxu0 0.0
        %458 = vmatpush.msra.mxu0 0.0
        %459 = vmatpush.msra.mxu0 0.0
        %v460 = vand.u32 %v307, 4294901760
        %v461 = vsub.f32 %v307, %v460
        %v462 = vand.u32 %v461, 4294901760
        %463 = vmatpush.msra.mxu0 %v462
        %v464 = vand.u32 %v343, 4294901760
        %465 = vmatmul.f32.gmra.mxu0 %v464
        %v466 = vpop.f32.mrf.mxu0
        %v467 = vadd.f32 %v443, %v466
        %468 = vdwg.mxu0
        %469 = vmatpush.msra.mxu0 0.0
        %470 = vmatpush.msra.mxu0 0.0
        %471 = vmatpush.msra.mxu0 0.0
        %472 = vmatpush.msra.mxu0 0.0
        %473 = vmatpush.msra.mxu0 0.0
        %474 = vmatpush.msra.mxu0 0.0
        %475 = vmatpush.msra.mxu0 0.0
        %476 = vmatpush.msra.mxu0 0.0
        %477 = vmatpush.msra.mxu0 0.0
        %478 = vmatpush.msra.mxu0 0.0
        %479 = vmatpush.msra.mxu0 0.0
        %480 = vmatpush.msra.mxu0 0.0
        %481 = vmatpush.msra.mxu0 0.0
        %482 = vmatpush.msra.mxu0 0.0
        %483 = vmatpush.msra.mxu0 0.0
        %v484 = vand.u32 %v307, 4294901760
        %485 = vmatpush.msra.mxu0 %v484
        %v486 = vand.u32 %v343, 4294901760
        %487 = vmatmul.f32.gmra.mxu0 %v486
        %v488 = vpop.f32.mrf.mxu0
        %v489 = vadd.f32 %v467, %v488
        %490 = vdwg.mxu0
        %491 = vmatpush.msra.mxu0 0.0
        %492 = vmatpush.msra.mxu0 0.0
        %493 = vmatpush.msra.mxu0 0.0
        %494 = vmatpush.msra.mxu0 0.0
        %495 = vmatpush.msra.mxu0 0.0
        %496 = vmatpush.msra.mxu0 0.0
        %497 = vmatpush.msra.mxu0 0.0
        %498 = vmatpush.msra.mxu0 0.0
        %499 = vmatpush.msra.mxu0 0.0
        %500 = vmatpush.msra.mxu0 0.0
        %501 = vmatpush.msra.mxu0 0.0
        %502 = vmatpush.msra.mxu0 0.0
        %503 = vmatpush.msra.mxu0 0.0
        %504 = vmatpush.msra.mxu0 0.0
        %505 = vmatpush.msra.mxu0 0.0
        %v506 = vand.u32 %v308, 4294901760
        %507 = vmatpush.msra.mxu0 %v506
        %v508 = vand.u32 %v343, 4294901760
        %v509 = vsub.f32 %v343, %v508
        %v510 = vand.u32 %v509, 4294901760
        %v511 = vsub.f32 %v509, %v510
        %v512 = vand.u32 %v511, 4294901760
        %513 = vmatmul.f32.gmra.mxu0 %v512
        %v514 = vpop.f32.mrf.mxu0
        %v515 = vadd.f32 0.0, %v514
        %516 = vdwg.mxu0
        %517 = vmatpush.msra.mxu0 0.0
        %518 = vmatpush.msra.mxu0 0.0
        %519 = vmatpush.msra.mxu0 0.0
        %520 = vmatpush.msra.mxu0 0.0
        %521 = vmatpush.msra.mxu0 0.0
        %522 = vmatpush.msra.mxu0 0.0
        %523 = vmatpush.msra.mxu0 0.0
        %524 = vmatpush.msra.mxu0 0.0
        %525 = vmatpush.msra.mxu0 0.0
        %526 = vmatpush.msra.mxu0 0.0
        %527 = vmatpush.msra.mxu0 0.0
        %528 = vmatpush.msra.mxu0 0.0
        %529 = vmatpush.msra.mxu0 0.0
        %530 = vmatpush.msra.mxu0 0.0
        %531 = vmatpush.msra.mxu0 0.0
        %v532 = vand.u32 %v308, 4294901760
        %v533 = vsub.f32 %v308, %v532
        %v534 = vand.u32 %v533, 4294901760
        %v535 = vsub.f32 %v533, %v534
        %v536 = vand.u32 %v535, 4294901760
        %537 = vmatpush.msra.mxu0 %v536
        %v538 = vand.u32 %v343, 4294901760
        %539 = vmatmul.f32.gmra.mxu0 %v538
        %v540 = vpop.f32.mrf.mxu0
        %v541 = vadd.f32 %v515, %v540
        %542 = vdwg.mxu0
        %543 = vmatpush.msra.mxu0 0.0
        %544 = vmatpush.msra.mxu0 0.0
        %545 = vmatpush.msra.mxu0 0.0
        %546 = vmatpush.msra.mxu0 0.0
        %547 = vmatpush.msra.mxu0 0.0
        %548 = vmatpush.msra.mxu0 0.0
        %549 = vmatpush.msra.mxu0 0.0
        %550 = vmatpush.msra.mxu0 0.0
        %551 = vmatpush.msra.mxu0 0.0
        %552 = vmatpush.msra.mxu0 0.0
        %553 = vmatpush.msra.mxu0 0.0
        %554 = vmatpush.msra.mxu0 0.0
        %555 = vmatpush.msra.mxu0 0.0
        %556 = vmatpush.msra.mxu0 0.0
        %557 = vmatpush.msra.mxu0 0.0
        %v558 = vand.u32 %v308, 4294901760
        %v559 = vsub.f32 %v308, %v558
        %560 = vmatpush.msra.mxu0 %v559
        %v561 = vand.u32 %v343, 4294901760
        %v562 = vsub.f32 %v343, %v561
        %563 = vmatmul.f32.gmra.mxu0 %v562
        %v564 = vpop.f32.mrf.mxu0
        %v565 = vadd.f32 %v541, %v564
        %566 = vdwg.mxu0
        %567 = vmatpush.msra.mxu0 0.0
        %568 = vmatpush.msra.mxu0 0.0
        %569 = vmatpush.msra.mxu0 0.0
        %570 = vmatpush.msra.mxu0 0.0
        %571 = vmatpush.msra.mxu0 0.0
        %572 = vmatpush.msra.mxu0 0.0
        %573 = vmatpush.msra.mxu0 0.0
        %574 = vmatpush.msra.mxu0 0.0
        %575 = vmatpush.msra.mxu0 0.0
        %576 = vmatpush.msra.mxu0 0.0
        %577 = vmatpush.msra.mxu0 0.0
        %578 = vmatpush.msra.mxu0 0.0
        %579 = vmatpush.msra.mxu0 0.0
        %580 = vmatpush.msra.mxu0 0.0
        %581 = vmatpush.msra.mxu0 0.0
        %v582 = vand.u32 %v308, 4294901760
        %583 = vmatpush.msra.mxu0 %v582
        %v584 = vand.u32 %v343, 4294901760
        %v585 = vsub.f32 %v343, %v584
        %v586 = vand.u32 %v585, 4294901760
        %587 = vmatmul.f32.gmra.mxu0 %v586
        %v588 = vpop.f32.mrf.mxu0
        %v589 = vadd.f32 %v565, %v588
        %590 = vdwg.mxu0
        %591 = vmatpush.msra.mxu0 0.0
        %592 = vmatpush.msra.mxu0 0.0
        %593 = vmatpush.msra.mxu0 0.0
        %594 = vmatpush.msra.mxu0 0.0
        %595 = vmatpush.msra.mxu0 0.0
        %596 = vmatpush.msra.mxu0 0.0
        %597 = vmatpush.msra.mxu0 0.0
        %598 = vmatpush.msra.mxu0 0.0
        %599 = vmatpush.msra.mxu0 0.0
        %600 = vmatpush.msra.mxu0 0.0
        %601 = vmatpush.msra.mxu0 0.0
        %602 = vmatpush.msra.mxu0 0.0
        %603 = vmatpush.msra.mxu0 0.0
        %604 = vmatpush.msra.mxu0 0.0
        %605 = vmatpush.msra.mxu0 0.0
        %v606 = vand.u32 %v308, 4294901760
        %v607 = vsub.f32 %v308, %v606
        %v608 = vand.u32 %v607, 4294901760
        %609 = vmatpush.msra.mxu0 %v608
        %v610 = vand.u32 %v343, 4294901760
        %611 = vmatmul.f32.gmra.mxu0 %v610
        %v612 = vpop.f32.mrf.mxu0
        %v613 = vadd.f32 %v589, %v612
        %614 = vdwg.mxu0
        %615 = vmatpush.msra.mxu0 0.0
        %616 = vmatpush.msra.mxu0 0.0
        %617 = vmatpush.msra.mxu0 0.0
        %618 = vmatpush.msra.mxu0 0.0
        %619 = vmatpush.msra.mxu0 0.0
        %620 = vmatpush.msra.mxu0 0.0
        %621 = vmatpush.msra.mxu0 0.0
        %622 = vmatpush.msra.mxu0 0.0
        %623 = vmatpush.msra.mxu0 0.0
        %624 = vmatpush.msra.mxu0 0.0
        %625 = vmatpush.msra.mxu0 0.0
        %626 = vmatpush.msra.mxu0 0.0
        %627 = vmatpush.msra.mxu0 0.0
        %628 = vmatpush.msra.mxu0 0.0
        %629 = vmatpush.msra.mxu0 0.0
        %v630 = vand.u32 %v308, 4294901760
        %631 = vmatpush.msra.mxu0 %v630
        %v632 = vand.u32 %v343, 4294901760
        %633 = vmatmul.f32.gmra.mxu0 %v632
        %v634 = vpop.f32.mrf.mxu0
        %v635 = vadd.f32 %v613, %v634
        %636 = vdwg.mxu0
        %v637 = vld [vmem:[%s287 + $0x8] sm:$0xff]
        %v638 = vld [vmem:[%s278 + $0x10] sm:$0xff]
        %v639 = vld [vmem:[%s278 + $0x18] sm:$0xff]
        %640 = vxpose.xlu0.b32.start [1/16] %v637, 128
        %641 = vxpose.xlu0.b32.cont [2/16] 0.0, 128
        %642 = vxpose.xlu0.b32.cont [3/16] 0.0, 128
        %643 = vxpose.xlu0.b32.cont [4/16] 0.0, 128
        %644 = vxpose.xlu0.b32.cont [5/16] 0.0, 128
        %645 = vxpose.xlu0.b32.cont [6/16] 0.0, 128
        %646 = vxpose.xlu0.b32.cont [7/16] 0.0, 128
        %647 = vxpose.xlu0.b32.cont [8/16] 0.0, 128
        %648 = vxpose.xlu0.b32.cont [9/16] 0.0, 128
        %649 = vxpose.xlu0.b32.cont [10/16] 0.0, 128
        %650 = vxpose.xlu0.b32.cont [11/16] 0.0, 128
        %651 = vxpose.xlu0.b32.cont [12/16] 0.0, 128
        %652 = vxpose.xlu0.b32.cont [13/16] 0.0, 128
        %653 = vxpose.xlu0.b32.cont [14/16] 0.0, 128
        %654 = vxpose.xlu0.b32.cont [15/16] 0.0, 128
        %655 = vxpose.xlu0.b32.end [16/16] 0.0, 128
        %v656 = vpop.trf.xlu0
        %v657 = vpop.trf.xlu0
        %v658 = vpop.trf.xlu0
        %v659 = vpop.trf.xlu0
        %v660 = vpop.trf.xlu0
        %v661 = vpop.trf.xlu0
        %v662 = vpop.trf.xlu0
        %v663 = vpop.trf.xlu0
        %v664 = vpop.trf.xlu0
        %v665 = vpop.trf.xlu0
        %v666 = vpop.trf.xlu0
        %v667 = vpop.trf.xlu0
        %v668 = vpop.trf.xlu0
        %v669 = vpop.trf.xlu0
        %v670 = vpop.trf.xlu0
        %v671 = vpop.trf.xlu0
        %v673 = vsel %vm341, %v656, 0
        %675 = vmatpush.msra.mxu0 0.0
        %676 = vmatpush.msra.mxu0 0.0
        %677 = vmatpush.msra.mxu0 0.0
        %678 = vmatpush.msra.mxu0 0.0
        %679 = vmatpush.msra.mxu0 0.0
        %680 = vmatpush.msra.mxu0 0.0
        %681 = vmatpush.msra.mxu0 0.0
        %682 = vmatpush.msra.mxu0 0.0
        %683 = vmatpush.msra.mxu0 0.0
        %684 = vmatpush.msra.mxu0 0.0
        %685 = vmatpush.msra.mxu0 0.0
        %686 = vmatpush.msra.mxu0 0.0
        %687 = vmatpush.msra.mxu0 0.0
        %688 = vmatpush.msra.mxu0 0.0
        %689 = vmatpush.msra.mxu0 0.0
        %v690 = vand.u32 %v638, 4294901760
        %691 = vmatpush.msra.mxu0 %v690
        %v692 = vand.u32 %v673, 4294901760
        %v693 = vsub.f32 %v673, %v692
        %v694 = vand.u32 %v693, 4294901760
        %v695 = vsub.f32 %v693, %v694
        %v696 = vand.u32 %v695, 4294901760
        %697 = vmatmul.f32.gmra.mxu0 %v696
        %v698 = vpop.f32.mrf.mxu0
        %v699 = vadd.f32 0.0, %v698
        %700 = vdwg.mxu0
        %701 = vmatpush.msra.mxu0 0.0
        %702 = vmatpush.msra.mxu0 0.0
        %703 = vmatpush.msra.mxu0 0.0
        %704 = vmatpush.msra.mxu0 0.0
        %705 = vmatpush.msra.mxu0 0.0
        %706 = vmatpush.msra.mxu0 0.0
        %707 = vmatpush.msra.mxu0 0.0
        %708 = vmatpush.msra.mxu0 0.0
        %709 = vmatpush.msra.mxu0 0.0
        %710 = vmatpush.msra.mxu0 0.0
        %711 = vmatpush.msra.mxu0 0.0
        %712 = vmatpush.msra.mxu0 0.0
        %713 = vmatpush.msra.mxu0 0.0
        %714 = vmatpush.msra.mxu0 0.0
        %715 = vmatpush.msra.mxu0 0.0
        %v716 = vand.u32 %v638, 4294901760
        %v717 = vsub.f32 %v638, %v716
        %v718 = vand.u32 %v717, 4294901760
        %v719 = vsub.f32 %v717, %v718
        %v720 = vand.u32 %v719, 4294901760
        %721 = vmatpush.msra.mxu0 %v720
        %v722 = vand.u32 %v673, 4294901760
        %723 = vmatmul.f32.gmra.mxu0 %v722
        %v724 = vpop.f32.mrf.mxu0
        %v725 = vadd.f32 %v699, %v724
        %726 = vdwg.mxu0
        %727 = vmatpush.msra.mxu0 0.0
        %728 = vmatpush.msra.mxu0 0.0
        %729 = vmatpush.msra.mxu0 0.0
        %730 = vmatpush.msra.mxu0 0.0
        %731 = vmatpush.msra.mxu0 0.0
        %732 = vmatpush.msra.mxu0 0.0
        %733 = vmatpush.msra.mxu0 0.0
        %734 = vmatpush.msra.mxu0 0.0
        %735 = vmatpush.msra.mxu0 0.0
        %736 = vmatpush.msra.mxu0 0.0
        %737 = vmatpush.msra.mxu0 0.0
        %738 = vmatpush.msra.mxu0 0.0
        %739 = vmatpush.msra.mxu0 0.0
        %740 = vmatpush.msra.mxu0 0.0
        %741 = vmatpush.msra.mxu0 0.0
        %v742 = vand.u32 %v638, 4294901760
        %v743 = vsub.f32 %v638, %v742
        %744 = vmatpush.msra.mxu0 %v743
        %v745 = vand.u32 %v673, 4294901760
        %v746 = vsub.f32 %v673, %v745
        %747 = vmatmul.f32.gmra.mxu0 %v746
        %v748 = vpop.f32.mrf.mxu0
        %v749 = vadd.f32 %v725, %v748
        %750 = vdwg.mxu0
        %751 = vmatpush.msra.mxu0 0.0
        %752 = vmatpush.msra.mxu0 0.0
        %753 = vmatpush.msra.mxu0 0.0
        %754 = vmatpush.msra.mxu0 0.0
        %755 = vmatpush.msra.mxu0 0.0
        %756 = vmatpush.msra.mxu0 0.0
        %757 = vmatpush.msra.mxu0 0.0
        %758 = vmatpush.msra.mxu0 0.0
        %759 = vmatpush.msra.mxu0 0.0
        %760 = vmatpush.msra.mxu0 0.0
        %761 = vmatpush.msra.mxu0 0.0
        %762 = vmatpush.msra.mxu0 0.0
        %763 = vmatpush.msra.mxu0 0.0
        %764 = vmatpush.msra.mxu0 0.0
        %765 = vmatpush.msra.mxu0 0.0
        %v766 = vand.u32 %v638, 4294901760
        %767 = vmatpush.msra.mxu0 %v766
        %v768 = vand.u32 %v673, 4294901760
        %v769 = vsub.f32 %v673, %v768
        %v770 = vand.u32 %v769, 4294901760
        %771 = vmatmul.f32.gmra.mxu0 %v770
        %v772 = vpop.f32.mrf.mxu0
        %v773 = vadd.f32 %v749, %v772
        %774 = vdwg.mxu0
        %775 = vmatpush.msra.mxu0 0.0
        %776 = vmatpush.msra.mxu0 0.0
        %777 = vmatpush.msra.mxu0 0.0
        %778 = vmatpush.msra.mxu0 0.0
        %779 = vmatpush.msra.mxu0 0.0
        %780 = vmatpush.msra.mxu0 0.0
        %781 = vmatpush.msra.mxu0 0.0
        %782 = vmatpush.msra.mxu0 0.0
        %783 = vmatpush.msra.mxu0 0.0
        %784 = vmatpush.msra.mxu0 0.0
        %785 = vmatpush.msra.mxu0 0.0
        %786 = vmatpush.msra.mxu0 0.0
        %787 = vmatpush.msra.mxu0 0.0
        %788 = vmatpush.msra.mxu0 0.0
        %789 = vmatpush.msra.mxu0 0.0
        %v790 = vand.u32 %v638, 4294901760
        %v791 = vsub.f32 %v638, %v790
        %v792 = vand.u32 %v791, 4294901760
        %793 = vmatpush.msra.mxu0 %v792
        %v794 = vand.u32 %v673, 4294901760
        %795 = vmatmul.f32.gmra.mxu0 %v794
        %v796 = vpop.f32.mrf.mxu0
        %v797 = vadd.f32 %v773, %v796
        %798 = vdwg.mxu0
        %799 = vmatpush.msra.mxu0 0.0
        %800 = vmatpush.msra.mxu0 0.0
        %801 = vmatpush.msra.mxu0 0.0
        %802 = vmatpush.msra.mxu0 0.0
        %803 = vmatpush.msra.mxu0 0.0
        %804 = vmatpush.msra.mxu0 0.0
        %805 = vmatpush.msra.mxu0 0.0
        %806 = vmatpush.msra.mxu0 0.0
        %807 = vmatpush.msra.mxu0 0.0
        %808 = vmatpush.msra.mxu0 0.0
        %809 = vmatpush.msra.mxu0 0.0
        %810 = vmatpush.msra.mxu0 0.0
        %811 = vmatpush.msra.mxu0 0.0
        %812 = vmatpush.msra.mxu0 0.0
        %813 = vmatpush.msra.mxu0 0.0
        %v814 = vand.u32 %v638, 4294901760
        %815 = vmatpush.msra.mxu0 %v814
        %v816 = vand.u32 %v673, 4294901760
        %817 = vmatmul.f32.gmra.mxu0 %v816
        %v818 = vpop.f32.mrf.mxu0
        %v819 = vadd.f32 %v797, %v818
        %820 = vdwg.mxu0
        %821 = vmatpush.msra.mxu0 0.0
        %822 = vmatpush.msra.mxu0 0.0
        %823 = vmatpush.msra.mxu0 0.0
        %824 = vmatpush.msra.mxu0 0.0
        %825 = vmatpush.msra.mxu0 0.0
        %826 = vmatpush.msra.mxu0 0.0
        %827 = vmatpush.msra.mxu0 0.0
        %828 = vmatpush.msra.mxu0 0.0
        %829 = vmatpush.msra.mxu0 0.0
        %830 = vmatpush.msra.mxu0 0.0
        %831 = vmatpush.msra.mxu0 0.0
        %832 = vmatpush.msra.mxu0 0.0
        %833 = vmatpush.msra.mxu0 0.0
        %834 = vmatpush.msra.mxu0 0.0
        %835 = vmatpush.msra.mxu0 0.0
        %v836 = vand.u32 %v639, 4294901760
        %837 = vmatpush.msra.mxu0 %v836
        %v838 = vand.u32 %v673, 4294901760
        %v839 = vsub.f32 %v673, %v838
        %v840 = vand.u32 %v839, 4294901760
        %v841 = vsub.f32 %v839, %v840
        %v842 = vand.u32 %v841, 4294901760
        %843 = vmatmul.f32.gmra.mxu0 %v842
        %v844 = vpop.f32.mrf.mxu0
        %v845 = vadd.f32 0.0, %v844
        %846 = vdwg.mxu0
        %847 = vmatpush.msra.mxu0 0.0
        %848 = vmatpush.msra.mxu0 0.0
        %849 = vmatpush.msra.mxu0 0.0
        %850 = vmatpush.msra.mxu0 0.0
        %851 = vmatpush.msra.mxu0 0.0
        %852 = vmatpush.msra.mxu0 0.0
        %853 = vmatpush.msra.mxu0 0.0
        %854 = vmatpush.msra.mxu0 0.0
        %855 = vmatpush.msra.mxu0 0.0
        %856 = vmatpush.msra.mxu0 0.0
        %857 = vmatpush.msra.mxu0 0.0
        %858 = vmatpush.msra.mxu0 0.0
        %859 = vmatpush.msra.mxu0 0.0
        %860 = vmatpush.msra.mxu0 0.0
        %861 = vmatpush.msra.mxu0 0.0
        %v862 = vand.u32 %v639, 4294901760
        %v863 = vsub.f32 %v639, %v862
        %v864 = vand.u32 %v863, 4294901760
        %v865 = vsub.f32 %v863, %v864
        %v866 = vand.u32 %v865, 4294901760
        %867 = vmatpush.msra.mxu0 %v866
        %v868 = vand.u32 %v673, 4294901760
        %869 = vmatmul.f32.gmra.mxu0 %v868
        %v870 = vpop.f32.mrf.mxu0
        %v871 = vadd.f32 %v845, %v870
        %872 = vdwg.mxu0
        %873 = vmatpush.msra.mxu0 0.0
        %874 = vmatpush.msra.mxu0 0.0
        %875 = vmatpush.msra.mxu0 0.0
        %876 = vmatpush.msra.mxu0 0.0
        %877 = vmatpush.msra.mxu0 0.0
        %878 = vmatpush.msra.mxu0 0.0
        %879 = vmatpush.msra.mxu0 0.0
        %880 = vmatpush.msra.mxu0 0.0
        %881 = vmatpush.msra.mxu0 0.0
        %882 = vmatpush.msra.mxu0 0.0
        %883 = vmatpush.msra.mxu0 0.0
        %884 = vmatpush.msra.mxu0 0.0
        %885 = vmatpush.msra.mxu0 0.0
        %886 = vmatpush.msra.mxu0 0.0
        %887 = vmatpush.msra.mxu0 0.0
        %v888 = vand.u32 %v639, 4294901760
        %v889 = vsub.f32 %v639, %v888
        %890 = vmatpush.msra.mxu0 %v889
        %v891 = vand.u32 %v673, 4294901760
        %v892 = vsub.f32 %v673, %v891
        %893 = vmatmul.f32.gmra.mxu0 %v892
        %v894 = vpop.f32.mrf.mxu0
        %v895 = vadd.f32 %v871, %v894
        %896 = vdwg.mxu0
        %897 = vmatpush.msra.mxu0 0.0
        %898 = vmatpush.msra.mxu0 0.0
        %899 = vmatpush.msra.mxu0 0.0
        %900 = vmatpush.msra.mxu0 0.0
        %901 = vmatpush.msra.mxu0 0.0
        %902 = vmatpush.msra.mxu0 0.0
        %903 = vmatpush.msra.mxu0 0.0
        %904 = vmatpush.msra.mxu0 0.0
        %905 = vmatpush.msra.mxu0 0.0
        %906 = vmatpush.msra.mxu0 0.0
        %907 = vmatpush.msra.mxu0 0.0
        %908 = vmatpush.msra.mxu0 0.0
        %909 = vmatpush.msra.mxu0 0.0
        %910 = vmatpush.msra.mxu0 0.0
        %911 = vmatpush.msra.mxu0 0.0
        %v912 = vand.u32 %v639, 4294901760
        %913 = vmatpush.msra.mxu0 %v912
        %v914 = vand.u32 %v673, 4294901760
        %v915 = vsub.f32 %v673, %v914
        %v916 = vand.u32 %v915, 4294901760
        %917 = vmatmul.f32.gmra.mxu0 %v916
        %v918 = vpop.f32.mrf.mxu0
        %v919 = vadd.f32 %v895, %v918
        %920 = vdwg.mxu0
        %921 = vmatpush.msra.mxu0 0.0
        %922 = vmatpush.msra.mxu0 0.0
        %923 = vmatpush.msra.mxu0 0.0
        %924 = vmatpush.msra.mxu0 0.0
        %925 = vmatpush.msra.mxu0 0.0
        %926 = vmatpush.msra.mxu0 0.0
        %927 = vmatpush.msra.mxu0 0.0
        %928 = vmatpush.msra.mxu0 0.0
        %929 = vmatpush.msra.mxu0 0.0
        %930 = vmatpush.msra.mxu0 0.0
        %931 = vmatpush.msra.mxu0 0.0
        %932 = vmatpush.msra.mxu0 0.0
        %933 = vmatpush.msra.mxu0 0.0
        %934 = vmatpush.msra.mxu0 0.0
        %935 = vmatpush.msra.mxu0 0.0
        %v936 = vand.u32 %v639, 4294901760
        %v937 = vsub.f32 %v639, %v936
        %v938 = vand.u32 %v937, 4294901760
        %939 = vmatpush.msra.mxu0 %v938
        %v940 = vand.u32 %v673, 4294901760
        %941 = vmatmul.f32.gmra.mxu0 %v940
        %v942 = vpop.f32.mrf.mxu0
        %v943 = vadd.f32 %v919, %v942
        %944 = vdwg.mxu0
        %945 = vmatpush.msra.mxu0 0.0
        %946 = vmatpush.msra.mxu0 0.0
        %947 = vmatpush.msra.mxu0 0.0
        %948 = vmatpush.msra.mxu0 0.0
        %949 = vmatpush.msra.mxu0 0.0
        %950 = vmatpush.msra.mxu0 0.0
        %951 = vmatpush.msra.mxu0 0.0
        %952 = vmatpush.msra.mxu0 0.0
        %953 = vmatpush.msra.mxu0 0.0
        %954 = vmatpush.msra.mxu0 0.0
        %955 = vmatpush.msra.mxu0 0.0
        %956 = vmatpush.msra.mxu0 0.0
        %957 = vmatpush.msra.mxu0 0.0
        %958 = vmatpush.msra.mxu0 0.0
        %959 = vmatpush.msra.mxu0 0.0
        %v960 = vand.u32 %v639, 4294901760
        %961 = vmatpush.msra.mxu0 %v960
        %v962 = vand.u32 %v673, 4294901760
        %963 = vmatmul.f32.gmra.mxu0 %v962
        %v964 = vpop.f32.mrf.mxu0
        %v965 = vadd.f32 %v943, %v964
        %966 = vdwg.mxu0
        %v967 = vld [vmem:[%s287 + $0x10] sm:$0xff]
        %968 = vxpose.xlu0.b32.start [1/16] %v967, 128
        %969 = vxpose.xlu0.b32.cont [2/16] 0.0, 128
        %970 = vxpose.xlu0.b32.cont [3/16] 0.0, 128
        %971 = vxpose.xlu0.b32.cont [4/16] 0.0, 128
        %972 = vxpose.xlu0.b32.cont [5/16] 0.0, 128
        %973 = vxpose.xlu0.b32.cont [6/16] 0.0, 128
        %974 = vxpose.xlu0.b32.cont [7/16] 0.0, 128
        %975 = vxpose.xlu0.b32.cont [8/16] 0.0, 128
        %976 = vxpose.xlu0.b32.cont [9/16] 0.0, 128
        %977 = vxpose.xlu0.b32.cont [10/16] 0.0, 128
        %978 = vxpose.xlu0.b32.cont [11/16] 0.0, 128
        %979 = vxpose.xlu0.b32.cont [12/16] 0.0, 128
        %980 = vxpose.xlu0.b32.cont [13/16] 0.0, 128
        %981 = vxpose.xlu0.b32.cont [14/16] 0.0, 128
        %982 = vxpose.xlu0.b32.cont [15/16] 0.0, 128
        %983 = vxpose.xlu0.b32.end [16/16] 0.0, 128
        %v984 = vpop.trf.xlu0
        %v985 = vpop.trf.xlu0
        %v986 = vpop.trf.xlu0
        %v987 = vpop.trf.xlu0
        %v988 = vpop.trf.xlu0
        %v989 = vpop.trf.xlu0
        %v990 = vpop.trf.xlu0
        %v991 = vpop.trf.xlu0
        %v992 = vpop.trf.xlu0
        %v993 = vpop.trf.xlu0
        %v994 = vpop.trf.xlu0
        %v995 = vpop.trf.xlu0
        %v996 = vpop.trf.xlu0
        %v997 = vpop.trf.xlu0
        %v998 = vpop.trf.xlu0
        %v999 = vpop.trf.xlu0
        %v1001 = vsel %vm341, %v984, 0
        %1003 = vmatpush.msra.mxu0 0.0
        %1004 = vmatpush.msra.mxu0 0.0
        %1005 = vmatpush.msra.mxu0 0.0
        %1006 = vmatpush.msra.mxu0 0.0
        %1007 = vmatpush.msra.mxu0 0.0
        %1008 = vmatpush.msra.mxu0 0.0
        %1009 = vmatpush.msra.mxu0 0.0
        %1010 = vmatpush.msra.mxu0 0.0
        %1011 = vmatpush.msra.mxu0 0.0
        %1012 = vmatpush.msra.mxu0 0.0
        %1013 = vmatpush.msra.mxu0 0.0
        %1014 = vmatpush.msra.mxu0 0.0
        %1015 = vmatpush.msra.mxu0 0.0
        %1016 = vmatpush.msra.mxu0 0.0
        %1017 = vmatpush.msra.mxu0 0.0
        %v1018 = vand.u32 %v307, 4294901760
        %1019 = vmatpush.msra.mxu0 %v1018
        %v1020 = vand.u32 %v1001, 4294901760
        %v1021 = vsub.f32 %v1001, %v1020
        %v1022 = vand.u32 %v1021, 4294901760
        %v1023 = vsub.f32 %v1021, %v1022
        %v1024 = vand.u32 %v1023, 4294901760
        %1025 = vmatmul.f32.gmra.mxu0 %v1024
        %v1026 = vpop.f32.mrf.mxu0
        %v1027 = vadd.f32 0.0, %v1026
        %1028 = vdwg.mxu0
        %1029 = vmatpush.msra.mxu0 0.0
        %1030 = vmatpush.msra.mxu0 0.0
        %1031 = vmatpush.msra.mxu0 0.0
        %1032 = vmatpush.msra.mxu0 0.0
        %1033 = vmatpush.msra.mxu0 0.0
        %1034 = vmatpush.msra.mxu0 0.0
        %1035 = vmatpush.msra.mxu0 0.0
        %1036 = vmatpush.msra.mxu0 0.0
        %1037 = vmatpush.msra.mxu0 0.0
        %1038 = vmatpush.msra.mxu0 0.0
        %1039 = vmatpush.msra.mxu0 0.0
        %1040 = vmatpush.msra.mxu0 0.0
        %1041 = vmatpush.msra.mxu0 0.0
        %1042 = vmatpush.msra.mxu0 0.0
        %1043 = vmatpush.msra.mxu0 0.0
        %v1044 = vand.u32 %v307, 4294901760
        %v1045 = vsub.f32 %v307, %v1044
        %v1046 = vand.u32 %v1045, 4294901760
        %v1047 = vsub.f32 %v1045, %v1046
        %v1048 = vand.u32 %v1047, 4294901760
        %1049 = vmatpush.msra.mxu0 %v1048
        %v1050 = vand.u32 %v1001, 4294901760
        %1051 = vmatmul.f32.gmra.mxu0 %v1050
        %v1052 = vpop.f32.mrf.mxu0
        %v1053 = vadd.f32 %v1027, %v1052
        %1054 = vdwg.mxu0
        %1055 = vmatpush.msra.mxu0 0.0
        %1056 = vmatpush.msra.mxu0 0.0
        %1057 = vmatpush.msra.mxu0 0.0
        %1058 = vmatpush.msra.mxu0 0.0
        %1059 = vmatpush.msra.mxu0 0.0
        %1060 = vmatpush.msra.mxu0 0.0
        %1061 = vmatpush.msra.mxu0 0.0
        %1062 = vmatpush.msra.mxu0 0.0
        %1063 = vmatpush.msra.mxu0 0.0
        %1064 = vmatpush.msra.mxu0 0.0
        %1065 = vmatpush.msra.mxu0 0.0
        %1066 = vmatpush.msra.mxu0 0.0
        %1067 = vmatpush.msra.mxu0 0.0
        %1068 = vmatpush.msra.mxu0 0.0
        %1069 = vmatpush.msra.mxu0 0.0
        %v1070 = vand.u32 %v307, 4294901760
        %v1071 = vsub.f32 %v307, %v1070
        %1072 = vmatpush.msra.mxu0 %v1071
        %v1073 = vand.u32 %v1001, 4294901760
        %v1074 = vsub.f32 %v1001, %v1073
        %1075 = vmatmul.f32.gmra.mxu0 %v1074
        %v1076 = vpop.f32.mrf.mxu0
        %v1077 = vadd.f32 %v1053, %v1076
        %1078 = vdwg.mxu0
        %1079 = vmatpush.msra.mxu0 0.0
        %1080 = vmatpush.msra.mxu0 0.0
        %1081 = vmatpush.msra.mxu0 0.0
        %1082 = vmatpush.msra.mxu0 0.0
        %1083 = vmatpush.msra.mxu0 0.0
        %1084 = vmatpush.msra.mxu0 0.0
        %1085 = vmatpush.msra.mxu0 0.0
        %1086 = vmatpush.msra.mxu0 0.0
        %1087 = vmatpush.msra.mxu0 0.0
        %1088 = vmatpush.msra.mxu0 0.0
        %1089 = vmatpush.msra.mxu0 0.0
        %1090 = vmatpush.msra.mxu0 0.0
        %1091 = vmatpush.msra.mxu0 0.0
        %1092 = vmatpush.msra.mxu0 0.0
        %1093 = vmatpush.msra.mxu0 0.0
        %v1094 = vand.u32 %v307, 4294901760
        %1095 = vmatpush.msra.mxu0 %v1094
        %v1096 = vand.u32 %v1001, 4294901760
        %v1097 = vsub.f32 %v1001, %v1096
        %v1098 = vand.u32 %v1097, 4294901760
        %1099 = vmatmul.f32.gmra.mxu0 %v1098
        %v1100 = vpop.f32.mrf.mxu0
        %v1101 = vadd.f32 %v1077, %v1100
        %1102 = vdwg.mxu0
        %1103 = vmatpush.msra.mxu0 0.0
        %1104 = vmatpush.msra.mxu0 0.0
        %1105 = vmatpush.msra.mxu0 0.0
        %1106 = vmatpush.msra.mxu0 0.0
        %1107 = vmatpush.msra.mxu0 0.0
        %1108 = vmatpush.msra.mxu0 0.0
        %1109 = vmatpush.msra.mxu0 0.0
        %1110 = vmatpush.msra.mxu0 0.0
        %1111 = vmatpush.msra.mxu0 0.0
        %1112 = vmatpush.msra.mxu0 0.0
        %1113 = vmatpush.msra.mxu0 0.0
        %1114 = vmatpush.msra.mxu0 0.0
        %1115 = vmatpush.msra.mxu0 0.0
        %1116 = vmatpush.msra.mxu0 0.0
        %1117 = vmatpush.msra.mxu0 0.0
        %v1118 = vand.u32 %v307, 4294901760
        %v1119 = vsub.f32 %v307, %v1118
        %v1120 = vand.u32 %v1119, 4294901760
        %1121 = vmatpush.msra.mxu0 %v1120
        %v1122 = vand.u32 %v1001, 4294901760
        %1123 = vmatmul.f32.gmra.mxu0 %v1122
        %v1124 = vpop.f32.mrf.mxu0
        %v1125 = vadd.f32 %v1101, %v1124
        %1126 = vdwg.mxu0
        %1127 = vmatpush.msra.mxu0 0.0
        %1128 = vmatpush.msra.mxu0 0.0
        %1129 = vmatpush.msra.mxu0 0.0
        %1130 = vmatpush.msra.mxu0 0.0
        %1131 = vmatpush.msra.mxu0 0.0
        %1132 = vmatpush.msra.mxu0 0.0
        %1133 = vmatpush.msra.mxu0 0.0
        %1134 = vmatpush.msra.mxu0 0.0
        %1135 = vmatpush.msra.mxu0 0.0
        %1136 = vmatpush.msra.mxu0 0.0
        %1137 = vmatpush.msra.mxu0 0.0
        %1138 = vmatpush.msra.mxu0 0.0
        %1139 = vmatpush.msra.mxu0 0.0
        %1140 = vmatpush.msra.mxu0 0.0
        %1141 = vmatpush.msra.mxu0 0.0
        %v1142 = vand.u32 %v307, 4294901760
        %1143 = vmatpush.msra.mxu0 %v1142
        %v1144 = vand.u32 %v1001, 4294901760
        %1145 = vmatmul.f32.gmra.mxu0 %v1144
        %v1146 = vpop.f32.mrf.mxu0
        %v1147 = vadd.f32 %v1125, %v1146
        %1148 = vdwg.mxu0
        %1149 = vmatpush.msra.mxu0 0.0
        %1150 = vmatpush.msra.mxu0 0.0
        %1151 = vmatpush.msra.mxu0 0.0
        %1152 = vmatpush.msra.mxu0 0.0
        %1153 = vmatpush.msra.mxu0 0.0
        %1154 = vmatpush.msra.mxu0 0.0
        %1155 = vmatpush.msra.mxu0 0.0
        %1156 = vmatpush.msra.mxu0 0.0
        %1157 = vmatpush.msra.mxu0 0.0
        %1158 = vmatpush.msra.mxu0 0.0
        %1159 = vmatpush.msra.mxu0 0.0
        %1160 = vmatpush.msra.mxu0 0.0
        %1161 = vmatpush.msra.mxu0 0.0
        %1162 = vmatpush.msra.mxu0 0.0
        %1163 = vmatpush.msra.mxu0 0.0
        %v1164 = vand.u32 %v308, 4294901760
        %1165 = vmatpush.msra.mxu0 %v1164
        %v1166 = vand.u32 %v1001, 4294901760
        %v1167 = vsub.f32 %v1001, %v1166
        %v1168 = vand.u32 %v1167, 4294901760
        %v1169 = vsub.f32 %v1167, %v1168
        %v1170 = vand.u32 %v1169, 4294901760
        %1171 = vmatmul.f32.gmra.mxu0 %v1170
        %v1172 = vpop.f32.mrf.mxu0
        %v1173 = vadd.f32 0.0, %v1172
        %1174 = vdwg.mxu0
        %1175 = vmatpush.msra.mxu0 0.0
        %1176 = vmatpush.msra.mxu0 0.0
        %1177 = vmatpush.msra.mxu0 0.0
        %1178 = vmatpush.msra.mxu0 0.0
        %1179 = vmatpush.msra.mxu0 0.0
        %1180 = vmatpush.msra.mxu0 0.0
        %1181 = vmatpush.msra.mxu0 0.0
        %1182 = vmatpush.msra.mxu0 0.0
        %1183 = vmatpush.msra.mxu0 0.0
        %1184 = vmatpush.msra.mxu0 0.0
        %1185 = vmatpush.msra.mxu0 0.0
        %1186 = vmatpush.msra.mxu0 0.0
        %1187 = vmatpush.msra.mxu0 0.0
        %1188 = vmatpush.msra.mxu0 0.0
        %1189 = vmatpush.msra.mxu0 0.0
        %v1190 = vand.u32 %v308, 4294901760
        %v1191 = vsub.f32 %v308, %v1190
        %v1192 = vand.u32 %v1191, 4294901760
        %v1193 = vsub.f32 %v1191, %v1192
        %v1194 = vand.u32 %v1193, 4294901760
        %1195 = vmatpush.msra.mxu0 %v1194
        %v1196 = vand.u32 %v1001, 4294901760
        %1197 = vmatmul.f32.gmra.mxu0 %v1196
        %v1198 = vpop.f32.mrf.mxu0
        %v1199 = vadd.f32 %v1173, %v1198
        %1200 = vdwg.mxu0
        %1201 = vmatpush.msra.mxu0 0.0
        %1202 = vmatpush.msra.mxu0 0.0
        %1203 = vmatpush.msra.mxu0 0.0
        %1204 = vmatpush.msra.mxu0 0.0
        %1205 = vmatpush.msra.mxu0 0.0
        %1206 = vmatpush.msra.mxu0 0.0
        %1207 = vmatpush.msra.mxu0 0.0
        %1208 = vmatpush.msra.mxu0 0.0
        %1209 = vmatpush.msra.mxu0 0.0
        %1210 = vmatpush.msra.mxu0 0.0
        %1211 = vmatpush.msra.mxu0 0.0
        %1212 = vmatpush.msra.mxu0 0.0
        %1213 = vmatpush.msra.mxu0 0.0
        %1214 = vmatpush.msra.mxu0 0.0
        %1215 = vmatpush.msra.mxu0 0.0
        %v1216 = vand.u32 %v308, 4294901760
        %v1217 = vsub.f32 %v308, %v1216
        %1218 = vmatpush.msra.mxu0 %v1217
        %v1219 = vand.u32 %v1001, 4294901760
        %v1220 = vsub.f32 %v1001, %v1219
        %1221 = vmatmul.f32.gmra.mxu0 %v1220
        %v1222 = vpop.f32.mrf.mxu0
        %v1223 = vadd.f32 %v1199, %v1222
        %1224 = vdwg.mxu0
        %1225 = vmatpush.msra.mxu0 0.0
        %1226 = vmatpush.msra.mxu0 0.0
        %1227 = vmatpush.msra.mxu0 0.0
        %1228 = vmatpush.msra.mxu0 0.0
        %1229 = vmatpush.msra.mxu0 0.0
        %1230 = vmatpush.msra.mxu0 0.0
        %1231 = vmatpush.msra.mxu0 0.0
        %1232 = vmatpush.msra.mxu0 0.0
        %1233 = vmatpush.msra.mxu0 0.0
        %1234 = vmatpush.msra.mxu0 0.0
        %1235 = vmatpush.msra.mxu0 0.0
        %1236 = vmatpush.msra.mxu0 0.0
        %1237 = vmatpush.msra.mxu0 0.0
        %1238 = vmatpush.msra.mxu0 0.0
        %1239 = vmatpush.msra.mxu0 0.0
        %v1240 = vand.u32 %v308, 4294901760
        %1241 = vmatpush.msra.mxu0 %v1240
        %v1242 = vand.u32 %v1001, 4294901760
        %v1243 = vsub.f32 %v1001, %v1242
        %v1244 = vand.u32 %v1243, 4294901760
        %1245 = vmatmul.f32.gmra.mxu0 %v1244
        %v1246 = vpop.f32.mrf.mxu0
        %v1247 = vadd.f32 %v1223, %v1246
        %1248 = vdwg.mxu0
        %1249 = vmatpush.msra.mxu0 0.0
        %1250 = vmatpush.msra.mxu0 0.0
        %1251 = vmatpush.msra.mxu0 0.0
        %1252 = vmatpush.msra.mxu0 0.0
        %1253 = vmatpush.msra.mxu0 0.0
        %1254 = vmatpush.msra.mxu0 0.0
        %1255 = vmatpush.msra.mxu0 0.0
        %1256 = vmatpush.msra.mxu0 0.0
        %1257 = vmatpush.msra.mxu0 0.0
        %1258 = vmatpush.msra.mxu0 0.0
        %1259 = vmatpush.msra.mxu0 0.0
        %1260 = vmatpush.msra.mxu0 0.0
        %1261 = vmatpush.msra.mxu0 0.0
        %1262 = vmatpush.msra.mxu0 0.0
        %1263 = vmatpush.msra.mxu0 0.0
        %v1264 = vand.u32 %v308, 4294901760
        %v1265 = vsub.f32 %v308, %v1264
        %v1266 = vand.u32 %v1265, 4294901760
        %1267 = vmatpush.msra.mxu0 %v1266
        %v1268 = vand.u32 %v1001, 4294901760
        %1269 = vmatmul.f32.gmra.mxu0 %v1268
        %v1270 = vpop.f32.mrf.mxu0
        %v1271 = vadd.f32 %v1247, %v1270
        %1272 = vdwg.mxu0
        %1273 = vmatpush.msra.mxu0 0.0
        %1274 = vmatpush.msra.mxu0 0.0
        %1275 = vmatpush.msra.mxu0 0.0
        %1276 = vmatpush.msra.mxu0 0.0
        %1277 = vmatpush.msra.mxu0 0.0
        %1278 = vmatpush.msra.mxu0 0.0
        %1279 = vmatpush.msra.mxu0 0.0
        %1280 = vmatpush.msra.mxu0 0.0
        %1281 = vmatpush.msra.mxu0 0.0
        %1282 = vmatpush.msra.mxu0 0.0
        %1283 = vmatpush.msra.mxu0 0.0
        %1284 = vmatpush.msra.mxu0 0.0
        %1285 = vmatpush.msra.mxu0 0.0
        %1286 = vmatpush.msra.mxu0 0.0
        %1287 = vmatpush.msra.mxu0 0.0
        %v1288 = vand.u32 %v308, 4294901760
        %1289 = vmatpush.msra.mxu0 %v1288
        %v1290 = vand.u32 %v1001, 4294901760
        %1291 = vmatmul.f32.gmra.mxu0 %v1290
        %v1292 = vpop.f32.mrf.mxu0
        %v1293 = vadd.f32 %v1271, %v1292
        %1294 = vdwg.mxu0
        %v1295 = vmax.f32 %v489, 1e-08
        %v1296 = vmax.f32 %v635, 1e-08
        %v1297 = vrcp.pop %v1295
        %v1298 = vrcp.pop %v1296
        %v1299 = vmul.f32 %v1295, %v1297
        %v1300 = vmul.f32 %v1296, %v1298
        %v1301 = vsub.f32 2.0, %v1299
        %v1302 = vsub.f32 2.0, %v1300
        %v1303 = vmul.f32 %v1297, %v1301
        %v1304 = vmul.f32 %v1298, %v1302
        %v1305 = vmul.f32 %v819, %v1303
        %v1306 = vmul.f32 %v965, %v1304
        %v1307 = vrot.slane %v1305, 4
        %v1308 = vmax.f32 %v1305, %v1307
        %v1309 = vrot.slane %v1308, 2
        %v1310 = vmax.f32 %v1308, %v1309
        %v1311 = vrot.slane %v1310, 1
        %v1312 = vmax.f32 %v1310, %v1311
        %v1313 = vrot.slane %v1306, 4
        %v1314 = vmax.f32 %v1306, %v1313
        %v1315 = vrot.slane %v1314, 2
        %v1316 = vmax.f32 %v1314, %v1315
        %v1317 = vrot.slane %v1316, 1
        %v1318 = vmax.f32 %v1316, %v1317
        %s1319 = scalar_lea.vmem %s269, 4 [#allocation7]
        %v1320 = vld [vmem:[%s1319] ss:$8 sm:$0x3]
        %v1323 = vrot.slane %v1318, 7
        %vm1324 = vcmask 1040384
        %v1325 = vsel %vm1324, %v1312, %v1323
        %v1327 = vmax.f32 %v1320, %v1325
        %v1328 = vlaneseq
        %vm1329 = vcmp.ge.s32.totalorder %v1328, 0
        %vm1330 = vcmp.lt.s32.totalorder %v1328, 256
        %vm1331 = vmand %vm1329, %vm1330
        %1332 = vst.msk [vmem:[%s1319] ss:$8 sm:$0x3] %vm1331, %v1327
        %1333 = vst.msk [vmem:[%s1319] ss:$8 sm:$0x0] %vm1331, %v1327
        %v1334 = vmul.f32 %v1305, %v1305
        %v1335 = vmul.f32 %v1306, %v1306
        %v1336 = vmul.f32 %v1334, %v1334
        %v1337 = vmul.f32 %v1335, %v1335
        %v1338 = vadd.f32 %v1336, 1.0
        %v1339 = vadd.f32 %v1337, 1.0
        %v1340 = vmax.f32 %v489, 1e-16
        %v1341 = vmax.f32 %v635, 1e-16
        %v1342 = vmul.f32 %v1338, %v1338
        %v1343 = vmul.f32 %v1339, %v1339
        %v1344 = vmul.f32 %v1340, %v1342
        %v1345 = vmul.f32 %v1341, %v1343
        %v1346 = vrsqrt.pop %v1344
        %v1347 = vmul.f32 %v1346, %v1344
        %v1348 = vmul.f32 %v1347, %v1346
        %v1349 = vmul.f32 0.5, %v1348
        %v1350 = vsub.f32 1.5, %v1349
        %v1351 = vmul.f32 %v1346, %v1350
        %vm1352 = vweird.f32 %v1344
        %vm1353 = vweird.f32 %v1346
        %vm1354 = vmor %vm1352, %vm1353
        %v1355 = vsel %vm1354, %v1346, %v1351
        %v1356 = vrsqrt.pop %v1345
        %v1357 = vmul.f32 %v1356, %v1345
        %v1358 = vmul.f32 %v1357, %v1356
        %v1359 = vmul.f32 0.5, %v1358
        %v1360 = vsub.f32 1.5, %v1359
        %v1361 = vmul.f32 %v1356, %v1360
        %vm1362 = vweird.f32 %v1345
        %vm1363 = vweird.f32 %v1356
        %vm1364 = vmor %vm1362, %vm1363
        %v1365 = vsel %vm1364, %v1356, %v1361
        %v1366 = vmul.f32 %v1147, %v1295
        %v1367 = vmul.f32 %v1293, %v1296
        %v1368 = vmul.f32 %v819, %v819
        %v1369 = vmul.f32 %v965, %v965
        %v1370 = vsub.f32 %v1366, %v1368
        %v1371 = vsub.f32 %v1367, %v1369
        %v1372 = vmul.f32 %v1370, %v1303
        %v1373 = vmul.f32 %v1371, %v1304
        %v1374 = vstv %s290
        %v1375 = vmul.f32 %v1372, %v1374
        %v1376 = vmul.f32 %v1373, %v1374
        %v1377 = vmin.f32 %v1375, 8.0
        %v1378 = vmin.f32 %v1376, 8.0
        %v1379 = vmul.f32 %v1377, 1.442695
        %v1380 = vpow.pop %v1379
        %v1381 = vmul.f32 %v1378, 1.442695
        %v1382 = vpow.pop %v1381
        %v1383 = vstv %s292
        %v1384 = vmul.f32 %v1383, %v1380
        %v1385 = vmul.f32 %v1383, %v1382
        %v1386 = vmul.f32 %v1384, %v1355
        %v1387 = vmul.f32 %v1385, %v1365
        %v1388 = vld [vmem:[%s229] sm:$0xff]
        %v1390 = vsel %vm341, %v1388, 0
        %1392 = vmatpush.msra.mxu0 0.0
        %1393 = vmatpush.msra.mxu0 0.0
        %1394 = vmatpush.msra.mxu0 0.0
        %1395 = vmatpush.msra.mxu0 0.0
        %1396 = vmatpush.msra.mxu0 0.0
        %1397 = vmatpush.msra.mxu0 0.0
        %1398 = vmatpush.msra.mxu0 0.0
        %1399 = vmatpush.msra.mxu0 0.0
        %1400 = vmatpush.msra.mxu0 0.0
        %1401 = vmatpush.msra.mxu0 0.0
        %1402 = vmatpush.msra.mxu0 0.0
        %1403 = vmatpush.msra.mxu0 0.0
        %1404 = vmatpush.msra.mxu0 0.0
        %1405 = vmatpush.msra.mxu0 0.0
        %1406 = vmatpush.msra.mxu0 0.0
        %v1407 = vand.u32 %v1386, 4294901760
        %1408 = vmatpush.msra.mxu0 %v1407
        %v1409 = vand.u32 %v1390, 4294901760
        %v1410 = vsub.f32 %v1390, %v1409
        %v1411 = vand.u32 %v1410, 4294901760
        %v1412 = vsub.f32 %v1410, %v1411
        %v1413 = vand.u32 %v1412, 4294901760
        %1414 = vmatmul.f32.gmra.mxu0 %v1413
        %v1415 = vpop.f32.mrf.mxu0
        %v1416 = vadd.f32 0.0, %v1415
        %1417 = vdwg.mxu0
        %1418 = vmatpush.msra.mxu0 0.0
        %1419 = vmatpush.msra.mxu0 0.0
        %1420 = vmatpush.msra.mxu0 0.0
        %1421 = vmatpush.msra.mxu0 0.0
        %1422 = vmatpush.msra.mxu0 0.0
        %1423 = vmatpush.msra.mxu0 0.0
        %1424 = vmatpush.msra.mxu0 0.0
        %1425 = vmatpush.msra.mxu0 0.0
        %1426 = vmatpush.msra.mxu0 0.0
        %1427 = vmatpush.msra.mxu0 0.0
        %1428 = vmatpush.msra.mxu0 0.0
        %1429 = vmatpush.msra.mxu0 0.0
        %1430 = vmatpush.msra.mxu0 0.0
        %1431 = vmatpush.msra.mxu0 0.0
        %1432 = vmatpush.msra.mxu0 0.0
        %v1433 = vand.u32 %v1386, 4294901760
        %v1434 = vsub.f32 %v1386, %v1433
        %v1435 = vand.u32 %v1434, 4294901760
        %v1436 = vsub.f32 %v1434, %v1435
        %v1437 = vand.u32 %v1436, 4294901760
        %1438 = vmatpush.msra.mxu0 %v1437
        %v1439 = vand.u32 %v1390, 4294901760
        %1440 = vmatmul.f32.gmra.mxu0 %v1439
        %v1441 = vpop.f32.mrf.mxu0
        %v1442 = vadd.f32 %v1416, %v1441
        %1443 = vdwg.mxu0
        %1444 = vmatpush.msra.mxu0 0.0
        %1445 = vmatpush.msra.mxu0 0.0
        %1446 = vmatpush.msra.mxu0 0.0
        %1447 = vmatpush.msra.mxu0 0.0
        %1448 = vmatpush.msra.mxu0 0.0
        %1449 = vmatpush.msra.mxu0 0.0
        %1450 = vmatpush.msra.mxu0 0.0
        %1451 = vmatpush.msra.mxu0 0.0
        %1452 = vmatpush.msra.mxu0 0.0
        %1453 = vmatpush.msra.mxu0 0.0
        %1454 = vmatpush.msra.mxu0 0.0
        %1455 = vmatpush.msra.mxu0 0.0
        %1456 = vmatpush.msra.mxu0 0.0
        %1457 = vmatpush.msra.mxu0 0.0
        %1458 = vmatpush.msra.mxu0 0.0
        %v1459 = vand.u32 %v1386, 4294901760
        %v1460 = vsub.f32 %v1386, %v1459
        %1461 = vmatpush.msra.mxu0 %v1460
        %v1462 = vand.u32 %v1390, 4294901760
        %v1463 = vsub.f32 %v1390, %v1462
        %1464 = vmatmul.f32.gmra.mxu0 %v1463
        %v1465 = vpop.f32.mrf.mxu0
        %v1466 = vadd.f32 %v1442, %v1465
        %1467 = vdwg.mxu0
        %1468 = vmatpush.msra.mxu0 0.0
        %1469 = vmatpush.msra.mxu0 0.0
        %1470 = vmatpush.msra.mxu0 0.0
        %1471 = vmatpush.msra.mxu0 0.0
        %1472 = vmatpush.msra.mxu0 0.0
        %1473 = vmatpush.msra.mxu0 0.0
        %1474 = vmatpush.msra.mxu0 0.0
        %1475 = vmatpush.msra.mxu0 0.0
        %1476 = vmatpush.msra.mxu0 0.0
        %1477 = vmatpush.msra.mxu0 0.0
        %1478 = vmatpush.msra.mxu0 0.0
        %1479 = vmatpush.msra.mxu0 0.0
        %1480 = vmatpush.msra.mxu0 0.0
        %1481 = vmatpush.msra.mxu0 0.0
        %1482 = vmatpush.msra.mxu0 0.0
        %v1483 = vand.u32 %v1386, 4294901760
        %1484 = vmatpush.msra.mxu0 %v1483
        %v1485 = vand.u32 %v1390, 4294901760
        %v1486 = vsub.f32 %v1390, %v1485
        %v1487 = vand.u32 %v1486, 4294901760
        %1488 = vmatmul.f32.gmra.mxu0 %v1487
        %v1489 = vpop.f32.mrf.mxu0
        %v1490 = vadd.f32 %v1466, %v1489
        %1491 = vdwg.mxu0
        %1492 = vmatpush.msra.mxu0 0.0
        %1493 = vmatpush.msra.mxu0 0.0
        %1494 = vmatpush.msra.mxu0 0.0
        %1495 = vmatpush.msra.mxu0 0.0
        %1496 = vmatpush.msra.mxu0 0.0
        %1497 = vmatpush.msra.mxu0 0.0
        %1498 = vmatpush.msra.mxu0 0.0
        %1499 = vmatpush.msra.mxu0 0.0
        %1500 = vmatpush.msra.mxu0 0.0
        %1501 = vmatpush.msra.mxu0 0.0
        %1502 = vmatpush.msra.mxu0 0.0
        %1503 = vmatpush.msra.mxu0 0.0
        %1504 = vmatpush.msra.mxu0 0.0
        %1505 = vmatpush.msra.mxu0 0.0
        %1506 = vmatpush.msra.mxu0 0.0
        %v1507 = vand.u32 %v1386, 4294901760
        %v1508 = vsub.f32 %v1386, %v1507
        %v1509 = vand.u32 %v1508, 4294901760
        %1510 = vmatpush.msra.mxu0 %v1509
        %v1511 = vand.u32 %v1390, 4294901760
        %1512 = vmatmul.f32.gmra.mxu0 %v1511
        %v1513 = vpop.f32.mrf.mxu0
        %v1514 = vadd.f32 %v1490, %v1513
        %1515 = vdwg.mxu0
        %1516 = vmatpush.msra.mxu0 0.0
        %1517 = vmatpush.msra.mxu0 0.0
        %1518 = vmatpush.msra.mxu0 0.0
        %1519 = vmatpush.msra.mxu0 0.0
        %1520 = vmatpush.msra.mxu0 0.0
        %1521 = vmatpush.msra.mxu0 0.0
        %1522 = vmatpush.msra.mxu0 0.0
        %1523 = vmatpush.msra.mxu0 0.0
        %1524 = vmatpush.msra.mxu0 0.0
        %1525 = vmatpush.msra.mxu0 0.0
        %1526 = vmatpush.msra.mxu0 0.0
        %1527 = vmatpush.msra.mxu0 0.0
        %1528 = vmatpush.msra.mxu0 0.0
        %1529 = vmatpush.msra.mxu0 0.0
        %1530 = vmatpush.msra.mxu0 0.0
        %v1531 = vand.u32 %v1386, 4294901760
        %1532 = vmatpush.msra.mxu0 %v1531
        %v1533 = vand.u32 %v1390, 4294901760
        %1534 = vmatmul.f32.gmra.mxu0 %v1533
        %v1535 = vpop.f32.mrf.mxu0
        %v1536 = vadd.f32 %v1514, %v1535
        %1537 = vdwg.mxu0
        %1538 = vmatpush.msra.mxu0 0.0
        %1539 = vmatpush.msra.mxu0 0.0
        %1540 = vmatpush.msra.mxu0 0.0
        %1541 = vmatpush.msra.mxu0 0.0
        %1542 = vmatpush.msra.mxu0 0.0
        %1543 = vmatpush.msra.mxu0 0.0
        %1544 = vmatpush.msra.mxu0 0.0
        %1545 = vmatpush.msra.mxu0 0.0
        %1546 = vmatpush.msra.mxu0 0.0
        %1547 = vmatpush.msra.mxu0 0.0
        %1548 = vmatpush.msra.mxu0 0.0
        %1549 = vmatpush.msra.mxu0 0.0
        %1550 = vmatpush.msra.mxu0 0.0
        %1551 = vmatpush.msra.mxu0 0.0
        %1552 = vmatpush.msra.mxu0 0.0
        %v1553 = vand.u32 %v1387, 4294901760
        %1554 = vmatpush.msra.mxu0 %v1553
        %v1555 = vand.u32 %v1390, 4294901760
        %v1556 = vsub.f32 %v1390, %v1555
        %v1557 = vand.u32 %v1556, 4294901760
        %v1558 = vsub.f32 %v1556, %v1557
        %v1559 = vand.u32 %v1558, 4294901760
        %1560 = vmatmul.f32.gmra.mxu0 %v1559
        %v1561 = vpop.f32.mrf.mxu0
        %v1562 = vadd.f32 0.0, %v1561
        %1563 = vdwg.mxu0
        %1564 = vmatpush.msra.mxu0 0.0
        %1565 = vmatpush.msra.mxu0 0.0
        %1566 = vmatpush.msra.mxu0 0.0
        %1567 = vmatpush.msra.mxu0 0.0
        %1568 = vmatpush.msra.mxu0 0.0
        %1569 = vmatpush.msra.mxu0 0.0
        %1570 = vmatpush.msra.mxu0 0.0
        %1571 = vmatpush.msra.mxu0 0.0
        %1572 = vmatpush.msra.mxu0 0.0
        %1573 = vmatpush.msra.mxu0 0.0
        %1574 = vmatpush.msra.mxu0 0.0
        %1575 = vmatpush.msra.mxu0 0.0
        %1576 = vmatpush.msra.mxu0 0.0
        %1577 = vmatpush.msra.mxu0 0.0
        %1578 = vmatpush.msra.mxu0 0.0
        %v1579 = vand.u32 %v1387, 4294901760
        %v1580 = vsub.f32 %v1387, %v1579
        %v1581 = vand.u32 %v1580, 4294901760
        %v1582 = vsub.f32 %v1580, %v1581
        %v1583 = vand.u32 %v1582, 4294901760
        %1584 = vmatpush.msra.mxu0 %v1583
        %v1585 = vand.u32 %v1390, 4294901760
        %1586 = vmatmul.f32.gmra.mxu0 %v1585
        %v1587 = vpop.f32.mrf.mxu0
        %v1588 = vadd.f32 %v1562, %v1587
        %1589 = vdwg.mxu0
        %1590 = vmatpush.msra.mxu0 0.0
        %1591 = vmatpush.msra.mxu0 0.0
        %1592 = vmatpush.msra.mxu0 0.0
        %1593 = vmatpush.msra.mxu0 0.0
        %1594 = vmatpush.msra.mxu0 0.0
        %1595 = vmatpush.msra.mxu0 0.0
        %1596 = vmatpush.msra.mxu0 0.0
        %1597 = vmatpush.msra.mxu0 0.0
        %1598 = vmatpush.msra.mxu0 0.0
        %1599 = vmatpush.msra.mxu0 0.0
        %1600 = vmatpush.msra.mxu0 0.0
        %1601 = vmatpush.msra.mxu0 0.0
        %1602 = vmatpush.msra.mxu0 0.0
        %1603 = vmatpush.msra.mxu0 0.0
        %1604 = vmatpush.msra.mxu0 0.0
        %v1605 = vand.u32 %v1387, 4294901760
        %v1606 = vsub.f32 %v1387, %v1605
        %1607 = vmatpush.msra.mxu0 %v1606
        %v1608 = vand.u32 %v1390, 4294901760
        %v1609 = vsub.f32 %v1390, %v1608
        %1610 = vmatmul.f32.gmra.mxu0 %v1609
        %v1611 = vpop.f32.mrf.mxu0
        %v1612 = vadd.f32 %v1588, %v1611
        %1613 = vdwg.mxu0
        %1614 = vmatpush.msra.mxu0 0.0
        %1615 = vmatpush.msra.mxu0 0.0
        %1616 = vmatpush.msra.mxu0 0.0
        %1617 = vmatpush.msra.mxu0 0.0
        %1618 = vmatpush.msra.mxu0 0.0
        %1619 = vmatpush.msra.mxu0 0.0
        %1620 = vmatpush.msra.mxu0 0.0
        %1621 = vmatpush.msra.mxu0 0.0
        %1622 = vmatpush.msra.mxu0 0.0
        %1623 = vmatpush.msra.mxu0 0.0
        %1624 = vmatpush.msra.mxu0 0.0
        %1625 = vmatpush.msra.mxu0 0.0
        %1626 = vmatpush.msra.mxu0 0.0
        %1627 = vmatpush.msra.mxu0 0.0
        %1628 = vmatpush.msra.mxu0 0.0
        %v1629 = vand.u32 %v1387, 4294901760
        %1630 = vmatpush.msra.mxu0 %v1629
        %v1631 = vand.u32 %v1390, 4294901760
        %v1632 = vsub.f32 %v1390, %v1631
        %v1633 = vand.u32 %v1632, 4294901760
        %1634 = vmatmul.f32.gmra.mxu0 %v1633
        %v1635 = vpop.f32.mrf.mxu0
        %v1636 = vadd.f32 %v1612, %v1635
        %1637 = vdwg.mxu0
        %1638 = vmatpush.msra.mxu0 0.0
        %1639 = vmatpush.msra.mxu0 0.0
        %1640 = vmatpush.msra.mxu0 0.0
        %1641 = vmatpush.msra.mxu0 0.0
        %1642 = vmatpush.msra.mxu0 0.0
        %1643 = vmatpush.msra.mxu0 0.0
        %1644 = vmatpush.msra.mxu0 0.0
        %1645 = vmatpush.msra.mxu0 0.0
        %1646 = vmatpush.msra.mxu0 0.0
        %1647 = vmatpush.msra.mxu0 0.0
        %1648 = vmatpush.msra.mxu0 0.0
        %1649 = vmatpush.msra.mxu0 0.0
        %1650 = vmatpush.msra.mxu0 0.0
        %1651 = vmatpush.msra.mxu0 0.0
        %1652 = vmatpush.msra.mxu0 0.0
        %v1653 = vand.u32 %v1387, 4294901760
        %v1654 = vsub.f32 %v1387, %v1653
        %v1655 = vand.u32 %v1654, 4294901760
        %1656 = vmatpush.msra.mxu0 %v1655
        %v1657 = vand.u32 %v1390, 4294901760
        %1658 = vmatmul.f32.gmra.mxu0 %v1657
        %v1659 = vpop.f32.mrf.mxu0
        %v1660 = vadd.f32 %v1636, %v1659
        %1661 = vdwg.mxu0
        %1662 = vmatpush.msra.mxu0 0.0
        %1663 = vmatpush.msra.mxu0 0.0
        %1664 = vmatpush.msra.mxu0 0.0
        %1665 = vmatpush.msra.mxu0 0.0
        %1666 = vmatpush.msra.mxu0 0.0
        %1667 = vmatpush.msra.mxu0 0.0
        %1668 = vmatpush.msra.mxu0 0.0
        %1669 = vmatpush.msra.mxu0 0.0
        %1670 = vmatpush.msra.mxu0 0.0
        %1671 = vmatpush.msra.mxu0 0.0
        %1672 = vmatpush.msra.mxu0 0.0
        %1673 = vmatpush.msra.mxu0 0.0
        %1674 = vmatpush.msra.mxu0 0.0
        %1675 = vmatpush.msra.mxu0 0.0
        %1676 = vmatpush.msra.mxu0 0.0
        %v1677 = vand.u32 %v1387, 4294901760
        %1678 = vmatpush.msra.mxu0 %v1677
        %v1679 = vand.u32 %v1390, 4294901760
        %1680 = vmatmul.f32.gmra.mxu0 %v1679
        %v1681 = vpop.f32.mrf.mxu0
        %v1682 = vadd.f32 %v1660, %v1681
        %1683 = vdwg.mxu0
        %v1684 = vld [vmem:[%s269] sm:$0xff]
        %v1685 = vld [vmem:[%s269 + $0x8] sm:$0xff]
        %v1686 = vadd.f32 %v1684, %v1536
        %v1687 = vadd.f32 %v1685, %v1682
        %1688 = vst [vmem:[%s269] sm:$0xff] %v1686
        %1689 = vst [vmem:[%s269 + $0x8] sm:$0xff] %v1687
        %s1690 = sand.u32 %s142, 1
        %s1691 = scalar_lea.sflag [#allocation6], %s1690
        %s1692 = sand.u32 %s142, 1
        %s1693 = smul.addr %s1692, 16
        %s1694 = scalar_lea.vmem [#allocation7], %s1693
        // Predicated region
        $region41: #{tpu_custom_call.1} parent=31 // pred_check
          %p1695 = pneg %p152
        $region42: #{tpu_custom_call.1} parent=31 // pred_check_branch
          %1697 = sbr.rel (%p1695) target = $region44
        $region43: #{tpu_custom_call.1} parent=31 // pred_region
          %s1698 = smul.u32 2, %s35
          %1700 = vsyncadd %s1691, 0
          %s1701 = smul.addr %s34, 2
          %s1702 = sadd.s32 %s1698, %s1701
          %s1703 = smul.addr %s1702, 8
          %s1704 = scalar_lea.hbm %s4, %s1703
          %s1706 = sshll.u32 %s1694, 4
          %s1707 = int_to_ptr.vmem [resolvable:$true] %s1706
          %s1708 = sshll.u32 %s1704, 4
          %s1709 = int_to_ptr.hbm [resolvable:$true] %s1708
          %1711 = dma.vmem_to_hbm [thread:$0]  %s1707, 256, %s1709, %s1691
        $region44: #{tpu_custom_call.1} parent=31 // pred_fallthru
          _
      $region32: #{tpu_custom_call.1} parent=5 // pred_fallthru
        _
      %p1712 = scmp.le.s32.totalorder 2, %s24
      // Predicated region
      $region45: #{tpu_custom_call.1} parent=5 // pred_check
        %p1713 = pneg %p1712
      $region46: #{tpu_custom_call.1} parent=5 // pred_check_branch
        %1715 = sbr.rel (%p1713) target = $region48
      $region47: #{tpu_custom_call.1} parent=5 // pred_region
        %s1716 = ssub.s32 %s24, 2
        // Predicated region
        $region49: #{tpu_custom_call.1} parent=47 // pred_check
          %p1717 = pneg %p158
        $region50: #{tpu_custom_call.1} parent=47 // pred_check_branch
          %1719 = sbr.rel (%p1717) target = $region52
        $region51: #{tpu_custom_call.1} parent=47 // pred_region
          %s1720 = sand.u32 %s143, 1
          %s1721 = scalar_lea.sflag [#allocation6], %s1720
          %s1722 = sand.u32 %s143, 1
          %s1723 = smul.addr %s1722, 16
          %s1724 = scalar_lea.vmem [#allocation7], %s1723
          %1726 = dma.done %s1721, 256
        $region52: #{tpu_custom_call.1} parent=47 // pred_fallthru
          _
      $region48: #{tpu_custom_call.1} parent=5 // pred_fallthru
        _
    $region6: #{tpu_custom_call.1} parent=1 // loop_footer
      %s28 = sadd.s32 1, %s24
    $region7: #{tpu_custom_call.1} parent=1 // loop_footer_branch
      %23 = sbr.rel target = $region3
    $region8: #{tpu_custom_call.1} parent=1 // loop_exit
      _
    %1727 = vsyncpa [#allocation5], 1
    %s1728 = scalar_lea.sflag [#allocation5], 1
    %1729 = vsyncpa %s1728, 1
    %1730 = vsyncpa [#allocation6], 1
    %s1731 = scalar_lea.sflag [#allocation6], 1
    %1732 = vsyncpa %s1731, 1

</llo_original>
